<compile_context>
chip_gen: v6e
topology: v6e:2x2x1
jax: 0.10.0
libtpu: 0.0.40
codegen_flags: <defaults>
</compile_context>

<pallas_src>
import functools

import jax
import jax.numpy as jnp
from jax import lax
from jax.experimental import pallas as pl
from jax.experimental.pallas import tpu as pltpu

LRELU_SLOPE = 0.1   # act='lrelu' -> nn.LeakyReLU(0.1)
LANES = 128


def _leaky(x):
    return jnp.where(x > 0, x, LRELU_SLOPE * x)


def bottleneck_kernel(w1_ref, b1_ref, w2_ref, b2_ref, x_ref, o_ref, *, H, W):
    """Single grid step = the whole (tiny) problem.

    w1_ref: SMEM (Cm*C1,)      flat [cm, c1]          1x1 conv, BN folded
    b1_ref: SMEM (Cm,)
    w2_ref: SMEM (C2*Cm*3*3,)  flat [c2, cm, kh, kw]  3x3 conv, BN folded
    b2_ref: SMEM (C2,)
    x_ref:  VMEM (N, C1, HW//128, 128)   lane-dense packed NCHW
    o_ref:  VMEM (N, C2, HW//128, 128)
    """
    N, C1, HW2, LN = x_ref.shape
    C2 = o_ref.shape[1]
    Cm = b1_ref.shape[0]
    S = N * HW2                       # sublane rows of a packed channel slab
    log2_w = W.bit_length() - 1       # W is a power of two (asserted in wrapper)

    def load_packed(c):
        # Per-channel slab with the batches stacked along sublanes: (S, 128).
        return jnp.concatenate([x_ref[n, c] for n in range(N)], axis=0)

    def roll_rows(a, k):
        # result[r] = a[(r + k) % S]   (static sublane rotate via slices+concat)
        k = k % S
        if k == 0:
            return a
        return jnp.concatenate([a[k:], a[:k]], axis=0)

    # ---- cv1: 1x1 conv as unrolled scalar-broadcast FMAs + LeakyReLU -------
    acc1 = [jnp.full((S, LN), b1_ref[cm], dtype=jnp.float32) for cm in range(Cm)]
    for c1 in range(C1):
        xc = load_packed(c1)                          # short live range
        for cm in range(Cm):
            acc1[cm] = acc1[cm] + w1_ref[cm * C1 + c1] * xc
    t = [_leaky(a) for a in acc1]

    # ---- zero-padding masks for the 3x3 "same" conv (built once, shift/AND) -
    row = lax.broadcasted_iota(jnp.int32, (S, LN), 0)
    lane = lax.broadcasted_iota(jnp.int32, (S, LN), 1)
    p = (row & (HW2 - 1)) * LN + lane                 # flat position inside its image
    ww = p & (W - 1)
    hh = p >> log2_w
    h_ok = {-1: hh >= 1, 0: None, 1: hh < (H - 1)}
    w_ok = {-1: ww >= 1, 0: None, 1: ww < (W - 1)}

    def _and(a, b):
        if a is None:
            return b
        if b is None:
            return a
        return jnp.logical_and(a, b)

    pad_mask = {(dh, dw): _and(h_ok[dh], w_ok[dw])
                for dh in (-1, 0, 1) for dw in (-1, 0, 1)}

    def tap(src, dh, dw):
        """src shifted by (dh, dw) with zero padding, in packed (S,128) layout.

        Flat roll over the packed batch*HW axis = lane roll + sublane-carry
        select; every wrap (cross-row / cross-batch) position is a padding
        position, so the edge mask also makes the flat roll exact.
        """
        d = dh * W + dw                               # |d| <= W+1 < 128
        if d == 0:
            s = src
        else:
            L = pltpu.roll(src, (-d) % LN, axis=1)    # lane roll (XLU slot)
            if d > 0:
                s = jnp.where(lane < LN - d, L, roll_rows(L, 1))
            else:
                s = jnp.where(lane >= -d, L, roll_rows(L, S - 1))
        m = pad_mask[(dh, dw)]
        if m is not None:
            s = jnp.where(m, s, 0.0)
        return s

    # ---- cv2: 3x3 conv = 9 shifted taps, unrolled scalar-broadcast FMAs ----
    acc2 = [jnp.full((S, LN), b2_ref[c2], dtype=jnp.float32) for c2 in range(C2)]
    for cm in range(Cm):
        for dh in (-1, 0, 1):
            for dw in (-1, 0, 1):
                s = tap(t[cm], dh, dw)
                for c2 in range(C2):
                    wi = ((c2 * Cm + cm) * 3 + (dh + 1)) * 3 + (dw + 1)
                    acc2[c2] = acc2[c2] + w2_ref[wi] * s

    # ---- LeakyReLU + residual add; lane-dense (128-wide) stores -------------
    for c2 in range(C2):
        y = (load_packed(c2) + _leaky(acc2[c2])).astype(o_ref.dtype)
        for n in range(N):
            o_ref[n, c2] = y[n * HW2:(n + 1) * HW2]


def bottleneck_pallas(x_nchw, w1_flat, b1_vec, w2_flat, b2_vec):
    """x_nchw: (N, C1, H, W) f32; returns (N, C2, H, W) f32."""
    N, C1, H, W = x_nchw.shape
    Cm = b1_vec.shape[0]
    C2 = b2_vec.shape[0]
    assert C1 == C2, "shortcut residual (add=True) requires c1 == c2"
    HW = H * W
    assert HW % LANES == 0, "H*W must be a multiple of 128 for lane-dense tiles"
    HW2 = HW // LANES
    assert W & (W - 1) == 0 and HW2 & (HW2 - 1) == 0, \
        "W and H*W/128 must be powers of two (shift/AND masks)"

    # Free, contiguous reshape only — no host-side transposes around the call.
    x_pack = x_nchw.reshape(N, C1, HW2, LANES)

    kernel = functools.partial(bottleneck_kernel, H=H, W=W)

    out = pl.pallas_call(
        kernel,
        out_shape=jax.ShapeDtypeStruct((N, C2, HW2, LANES), x_nchw.dtype),
        grid=(1,),   # whole problem in one step; see scale-up notes above
        in_specs=[
            pl.BlockSpec(memory_space=pltpu.MemorySpace.SMEM),   # w1 (flat)
            pl.BlockSpec(memory_space=pltpu.MemorySpace.SMEM),   # b1
            pl.BlockSpec(memory_space=pltpu.MemorySpace.SMEM),   # w2 (flat)
            pl.BlockSpec(memory_space=pltpu.MemorySpace.SMEM),   # b2
            pl.BlockSpec((N, C1, HW2, LANES), lambda i: (0, 0, 0, 0)),   # x
        ],
        out_specs=pl.BlockSpec((N, C2, HW2, LANES), lambda i: (0, 0, 0, 0)),
        compiler_params=pltpu.CompilerParams(
            dimension_semantics=("arbitrary",)),
    )(w1_flat, b1_vec, w2_flat, b2_vec, x_pack)

    return out.reshape(N, C2, H, W)


def fold_bn(w_oihw, gamma, beta, mean, var, eps=1e-5):
    """Fold eval-mode BatchNorm2d into a bias-free conv. Exact."""
    scale = gamma / jnp.sqrt(var + eps)
    w_f = w_oihw * scale[:, None, None, None]
    b_f = beta - mean * scale
    return w_f, b_f


def reference_forward(x, w1f, b1f, w2f, b2f):
    """Pure-JAX reference of the PyTorch forward (BN already folded)."""
    dn = ('NCHW', 'OIHW', 'NCHW')
    y = lax.conv_general_dilated(x, w1f, (1, 1), 'VALID', dimension_numbers=dn)
    y = _leaky(y + b1f[None, :, None, None])
    y = lax.conv_general_dilated(y, w2f, (1, 1), ((1, 1), (1, 1)),
                                 dimension_numbers=dn)
    y = _leaky(y + b2f[None, :, None, None])
    return x + y


if __name__ == "__main__":
    # Module config: c1 = c2 = 4, shortcut=True, e=0.5 -> c_ = 2, depthwise=False
    N, C1, H, W = 2, 4, 16, 16
    C2 = 4
    Cm = int(C2 * 0.5)

    key = jax.random.PRNGKey(0)
    ks = jax.random.split(key, 16)

    x = jax.random.normal(ks[0], (N, C1, H, W), jnp.float32)

    # cv1: Conv2d(C1, Cm, 1, bias=False) + BN(Cm)
    w1_conv = jax.random.normal(ks[1], (Cm, C1, 1, 1), jnp.float32) * 0.3
    g1 = jax.random.uniform(ks[2], (Cm,), jnp.float32, 0.5, 1.5)
    be1 = jax.random.normal(ks[3], (Cm,), jnp.float32) * 0.1
    m1 = jax.random.normal(ks[4], (Cm,), jnp.float32) * 0.1
    v1 = jax.random.uniform(ks[5], (Cm,), jnp.float32, 0.5, 1.5)

    # cv2: Conv2d(Cm, C2, 3, padding=1, bias=False) + BN(C2)
    w2_conv = jax.random.normal(ks[6], (C2, Cm, 3, 3), jnp.float32) * 0.3
    g2 = jax.random.uniform(ks[7], (C2,), jnp.float32, 0.5, 1.5)
    be2 = jax.random.normal(ks[8], (C2,), jnp.float32) * 0.1
    m2 = jax.random.normal(ks[9], (C2,), jnp.float32) * 0.1
    v2 = jax.random.uniform(ks[10], (C2,), jnp.float32, 0.5, 1.5)

    # Fold BN into the convs (plain-JAX glue, eval-mode semantics).
    w1f, b1f = fold_bn(w1_conv, g1, be1, m1, v1)   # (Cm, C1, 1, 1), (Cm,)
    w2f, b2f = fold_bn(w2_conv, g2, be2, m2, v2)   # (C2, Cm, 3, 3), (C2,)

    # Kernel-side weight layouts: flat 1-D SMEM scalar tables.
    w1_flat = w1f[:, :, 0, 0].reshape(-1)          # (Cm*C1,)   [cm, c1]
    w2_flat = w2f.reshape(-1)                      # (C2*Cm*9,) [c2, cm, kh, kw]
    b1_vec = b1f.reshape(-1)                       # (Cm,)
    b2_vec = b2f.reshape(-1)                       # (C2,)

    out = bottleneck_pallas(x, w1_flat, b1_vec, w2_flat, b2_vec)
    out = jax.block_until_ready(out)

    ref = reference_forward(x, w1f, b1f, w2f, b2f)
    assert out.shape == (N, C2, H, W)
    assert jnp.allclose(out, ref, atol=1e-3, rtol=1e-3), (
        float(jnp.max(jnp.abs(out - ref))))

    print("KERNEL_OK")
</pallas_src>

<mosaic_0001>
module attributes {stable_mosaic.version = 11 : i64} {
  func.func @bottleneck_kernel(%arg0: i32, %arg1: memref<8xf32, #tpu.memory_space<smem>>, %arg2: memref<2xf32, #tpu.memory_space<smem>>, %arg3: memref<72xf32, #tpu.memory_space<smem>>, %arg4: memref<4xf32, #tpu.memory_space<smem>>, %arg5: memref<2x4x2x128xf32, #tpu.memory_space<vmem>>, %arg6: memref<2x4x2x128xf32, #tpu.memory_space<vmem>>) attributes {dimension_semantics = [#tpu.dimension_semantics<arbitrary>], iteration_bounds = array<i64: 1>, scalar_prefetch = 0 : i64, scratch_operands = 0 : i64, tpu.core_type = #tpu.core_type<tc>, window_params = [{transform_indices = @transform_0, window_bounds = array<i64: 8>}, {transform_indices = @transform_1, window_bounds = array<i64: 2>}, {transform_indices = @transform_2, window_bounds = array<i64: 72>}, {transform_indices = @transform_3, window_bounds = array<i64: 4>}, {pipeline_mode = #tpu.pipeline_mode<synchronous>, transform_indices = @transform_4, window_bounds = array<i64: 2, 4, 2, 128>}, {pipeline_mode = #tpu.pipeline_mode<synchronous>, transform_indices = @transform_5, window_bounds = array<i64: 2, 4, 2, 128>}]} {
    %c0 = arith.constant 0 : index
    %0 = memref.load %arg2[%c0] : memref<2xf32, #tpu.memory_space<smem>>
    %1 = vector.broadcast %0 : f32 to vector<4x128xf32>
    %c1 = arith.constant 1 : index
    %2 = memref.load %arg2[%c1] : memref<2xf32, #tpu.memory_space<smem>>
    %3 = vector.broadcast %2 : f32 to vector<4x128xf32>
    %c0_0 = arith.constant 0 : index
    %c0_1 = arith.constant 0 : index
    %c0_2 = arith.constant 0 : index
    %c0_3 = arith.constant 0 : index
    %4 = vector.load %arg5[%c0_0, %c0_1, %c0_2, %c0_3] : memref<2x4x2x128xf32, #tpu.memory_space<vmem>>, vector<1x1x2x128xf32>
    %5 = vector.shape_cast %4 : vector<1x1x2x128xf32> to vector<2x128xf32>
    %c1_4 = arith.constant 1 : index
    %c0_5 = arith.constant 0 : index
    %c0_6 = arith.constant 0 : index
    %c0_7 = arith.constant 0 : index
    %6 = vector.load %arg5[%c1_4, %c0_5, %c0_6, %c0_7] : memref<2x4x2x128xf32, #tpu.memory_space<vmem>>, vector<1x1x2x128xf32>
    %7 = vector.shape_cast %6 : vector<1x1x2x128xf32> to vector<2x128xf32>
    %8 = tpu.concatenate %5, %7 in 0 : vector<2x128xf32>, vector<2x128xf32> -> vector<4x128xf32>
    %c0_8 = arith.constant 0 : index
    %9 = memref.load %arg1[%c0_8] : memref<8xf32, #tpu.memory_space<smem>>
    %10 = vector.broadcast %9 : f32 to vector<4x128xf32>
    %11 = arith.mulf %10, %8 : vector<4x128xf32>
    %12 = arith.addf %1, %11 : vector<4x128xf32>
    %c4 = arith.constant 4 : index
    %13 = memref.load %arg1[%c4] : memref<8xf32, #tpu.memory_space<smem>>
    %14 = vector.broadcast %13 : f32 to vector<4x128xf32>
    %15 = arith.mulf %14, %8 : vector<4x128xf32>
    %16 = arith.addf %3, %15 : vector<4x128xf32>
    %c0_9 = arith.constant 0 : index
    %c1_10 = arith.constant 1 : index
    %c0_11 = arith.constant 0 : index
    %c0_12 = arith.constant 0 : index
    %17 = vector.load %arg5[%c0_9, %c1_10, %c0_11, %c0_12] : memref<2x4x2x128xf32, #tpu.memory_space<vmem>>, vector<1x1x2x128xf32>
    %18 = vector.shape_cast %17 : vector<1x1x2x128xf32> to vector<2x128xf32>
    %c1_13 = arith.constant 1 : index
    %c1_14 = arith.constant 1 : index
    %c0_15 = arith.constant 0 : index
    %c0_16 = arith.constant 0 : index
    %19 = vector.load %arg5[%c1_13, %c1_14, %c0_15, %c0_16] : memref<2x4x2x128xf32, #tpu.memory_space<vmem>>, vector<1x1x2x128xf32>
    %20 = vector.shape_cast %19 : vector<1x1x2x128xf32> to vector<2x128xf32>
    %21 = tpu.concatenate %18, %20 in 0 : vector<2x128xf32>, vector<2x128xf32> -> vector<4x128xf32>
    %c1_17 = arith.constant 1 : index
    %22 = memref.load %arg1[%c1_17] : memref<8xf32, #tpu.memory_space<smem>>
    %23 = vector.broadcast %22 : f32 to vector<4x128xf32>
    %24 = arith.mulf %23, %21 : vector<4x128xf32>
    %25 = arith.addf %12, %24 : vector<4x128xf32>
    %c5 = arith.constant 5 : index
    %26 = memref.load %arg1[%c5] : memref<8xf32, #tpu.memory_space<smem>>
    %27 = vector.broadcast %26 : f32 to vector<4x128xf32>
    %28 = arith.mulf %27, %21 : vector<4x128xf32>
    %29 = arith.addf %16, %28 : vector<4x128xf32>
    %c0_18 = arith.constant 0 : index
    %c2 = arith.constant 2 : index
    %c0_19 = arith.constant 0 : index
    %c0_20 = arith.constant 0 : index
    %30 = vector.load %arg5[%c0_18, %c2, %c0_19, %c0_20] : memref<2x4x2x128xf32, #tpu.memory_space<vmem>>, vector<1x1x2x128xf32>
    %31 = vector.shape_cast %30 : vector<1x1x2x128xf32> to vector<2x128xf32>
    %c1_21 = arith.constant 1 : index
    %c2_22 = arith.constant 2 : index
    %c0_23 = arith.constant 0 : index
    %c0_24 = arith.constant 0 : index
    %32 = vector.load %arg5[%c1_21, %c2_22, %c0_23, %c0_24] : memref<2x4x2x128xf32, #tpu.memory_space<vmem>>, vector<1x1x2x128xf32>
    %33 = vector.shape_cast %32 : vector<1x1x2x128xf32> to vector<2x128xf32>
    %34 = tpu.concatenate %31, %33 in 0 : vector<2x128xf32>, vector<2x128xf32> -> vector<4x128xf32>
    %c2_25 = arith.constant 2 : index
    %35 = memref.load %arg1[%c2_25] : memref<8xf32, #tpu.memory_space<smem>>
    %36 = vector.broadcast %35 : f32 to vector<4x128xf32>
    %37 = arith.mulf %36, %34 : vector<4x128xf32>
    %38 = arith.addf %25, %37 : vector<4x128xf32>
    %c6 = arith.constant 6 : index
    %39 = memref.load %arg1[%c6] : memref<8xf32, #tpu.memory_space<smem>>
    %40 = vector.broadcast %39 : f32 to vector<4x128xf32>
    %41 = arith.mulf %40, %34 : vector<4x128xf32>
    %42 = arith.addf %29, %41 : vector<4x128xf32>
    %c0_26 = arith.constant 0 : index
    %c3 = arith.constant 3 : index
    %c0_27 = arith.constant 0 : index
    %c0_28 = arith.constant 0 : index
    %43 = vector.load %arg5[%c0_26, %c3, %c0_27, %c0_28] : memref<2x4x2x128xf32, #tpu.memory_space<vmem>>, vector<1x1x2x128xf32>
    %44 = vector.shape_cast %43 : vector<1x1x2x128xf32> to vector<2x128xf32>
    %c1_29 = arith.constant 1 : index
    %c3_30 = arith.constant 3 : index
    %c0_31 = arith.constant 0 : index
    %c0_32 = arith.constant 0 : index
    %45 = vector.load %arg5[%c1_29, %c3_30, %c0_31, %c0_32] : memref<2x4x2x128xf32, #tpu.memory_space<vmem>>, vector<1x1x2x128xf32>
    %46 = vector.shape_cast %45 : vector<1x1x2x128xf32> to vector<2x128xf32>
    %47 = tpu.concatenate %44, %46 in 0 : vector<2x128xf32>, vector<2x128xf32> -> vector<4x128xf32>
    %c3_33 = arith.constant 3 : index
    %48 = memref.load %arg1[%c3_33] : memref<8xf32, #tpu.memory_space<smem>>
    %49 = vector.broadcast %48 : f32 to vector<4x128xf32>
    %50 = arith.mulf %49, %47 : vector<4x128xf32>
    %51 = arith.addf %38, %50 : vector<4x128xf32>
    %c7 = arith.constant 7 : index
    %52 = memref.load %arg1[%c7] : memref<8xf32, #tpu.memory_space<smem>>
    %53 = vector.broadcast %52 : f32 to vector<4x128xf32>
    %54 = arith.mulf %53, %47 : vector<4x128xf32>
    %55 = arith.addf %42, %54 : vector<4x128xf32>
    %cst = arith.constant 0.000000e+00 : f32
    %56 = vector.broadcast %cst : f32 to vector<4x128xf32>
    %57 = arith.cmpf ogt, %51, %56 : vector<4x128xf32>
    %cst_34 = arith.constant 1.000000e-01 : f32
    %58 = vector.broadcast %cst_34 : f32 to vector<4x128xf32>
    %59 = arith.mulf %58, %51 : vector<4x128xf32>
    %60 = arith.select %57, %51, %59 : vector<4x128xi1>, vector<4x128xf32>
    %cst_35 = arith.constant 0.000000e+00 : f32
    %61 = vector.broadcast %cst_35 : f32 to vector<4x128xf32>
    %62 = arith.cmpf ogt, %55, %61 : vector<4x128xf32>
    %cst_36 = arith.constant 1.000000e-01 : f32
    %63 = vector.broadcast %cst_36 : f32 to vector<4x128xf32>
    %64 = arith.mulf %63, %55 : vector<4x128xf32>
    %65 = arith.select %62, %55, %64 : vector<4x128xi1>, vector<4x128xf32>
    %66 = tpu.iota {dimensions = array<i32: 0>} : vector<4x128xi32>
    %67 = tpu.iota {dimensions = array<i32: 1>} : vector<4x128xi32>
    %c1_i32 = arith.constant 1 : i32
    %68 = vector.broadcast %c1_i32 : i32 to vector<4x128xi32>
    %69 = arith.andi %66, %68 : vector<4x128xi32>
    %c128_i32 = arith.constant 128 : i32
    %70 = vector.broadcast %c128_i32 : i32 to vector<4x128xi32>
    %71 = arith.muli %69, %70 : vector<4x128xi32>
    %72 = arith.addi %71, %67 : vector<4x128xi32>
    %c15_i32 = arith.constant 15 : i32
    %73 = vector.broadcast %c15_i32 : i32 to vector<4x128xi32>
    %74 = arith.andi %72, %73 : vector<4x128xi32>
    %c4_i32 = arith.constant 4 : i32
    %75 = vector.broadcast %c4_i32 : i32 to vector<4x128xi32>
    %76 = arith.shrsi %72, %75 : vector<4x128xi32>
    %c1_i32_37 = arith.constant 1 : i32
    %77 = vector.broadcast %c1_i32_37 : i32 to vector<4x128xi32>
    %78 = arith.cmpi sge, %76, %77 : vector<4x128xi32>
    %c15_i32_38 = arith.constant 15 : i32
    %79 = vector.broadcast %c15_i32_38 : i32 to vector<4x128xi32>
    %80 = arith.cmpi slt, %76, %79 : vector<4x128xi32>
    %c1_i32_39 = arith.constant 1 : i32
    %81 = vector.broadcast %c1_i32_39 : i32 to vector<4x128xi32>
    %82 = arith.cmpi sge, %74, %81 : vector<4x128xi32>
    %c15_i32_40 = arith.constant 15 : i32
    %83 = vector.broadcast %c15_i32_40 : i32 to vector<4x128xi32>
    %84 = arith.cmpi slt, %74, %83 : vector<4x128xi32>
    %85 = arith.andi %78, %82 : vector<4x128xi1>
    %86 = arith.andi %78, %84 : vector<4x128xi1>
    %87 = arith.andi %80, %82 : vector<4x128xi1>
    %88 = arith.andi %80, %84 : vector<4x128xi1>
    %c0_41 = arith.constant 0 : index
    %89 = memref.load %arg4[%c0_41] : memref<4xf32, #tpu.memory_space<smem>>
    %90 = vector.broadcast %89 : f32 to vector<4x128xf32>
    %c1_42 = arith.constant 1 : index
    %91 = memref.load %arg4[%c1_42] : memref<4xf32, #tpu.memory_space<smem>>
    %92 = vector.broadcast %91 : f32 to vector<4x128xf32>
    %c2_43 = arith.constant 2 : index
    %93 = memref.load %arg4[%c2_43] : memref<4xf32, #tpu.memory_space<smem>>
    %94 = vector.broadcast %93 : f32 to vector<4x128xf32>
    %c3_44 = arith.constant 3 : index
    %95 = memref.load %arg4[%c3_44] : memref<4xf32, #tpu.memory_space<smem>>
    %96 = vector.broadcast %95 : f32 to vector<4x128xf32>
    %c17_i32 = arith.constant 17 : i32
    %97 = tpu.dynamic_rotate %60 by %c17_i32 dim 1 : vector<4x128xf32>, i32 -> vector<4x128xf32>
    %c17_i32_45 = arith.constant 17 : i32
    %98 = vector.broadcast %c17_i32_45 : i32 to vector<4x128xi32>
    %99 = arith.cmpi sge, %67, %98 : vector<4x128xi32>
    %100 = vector.extract_strided_slice %97 {offsets = [3, 0], sizes = [1, 128], strides = [1, 1]} : vector<4x128xf32> to vector<1x128xf32>
    %101 = vector.extract_strided_slice %97 {offsets = [0, 0], sizes = [3, 128], strides = [1, 1]} : vector<4x128xf32> to vector<3x128xf32>
    %102 = tpu.concatenate %100, %101 in 0 : vector<1x128xf32>, vector<3x128xf32> -> vector<4x128xf32>
    %103 = arith.select %99, %97, %102 : vector<4x128xi1>, vector<4x128xf32>
    %cst_46 = arith.constant 0.000000e+00 : f32
    %104 = vector.broadcast %cst_46 : f32 to vector<4x128xf32>
    %105 = arith.select %85, %103, %104 : vector<4x128xi1>, vector<4x128xf32>
    %c0_47 = arith.constant 0 : index
    %106 = memref.load %arg3[%c0_47] : memref<72xf32, #tpu.memory_space<smem>>
    %107 = vector.broadcast %106 : f32 to vector<4x128xf32>
    %108 = arith.mulf %107, %105 : vector<4x128xf32>
    %109 = arith.addf %90, %108 : vector<4x128xf32>
    %c18 = arith.constant 18 : index
    %110 = memref.load %arg3[%c18] : memref<72xf32, #tpu.memory_space<smem>>
    %111 = vector.broadcast %110 : f32 to vector<4x128xf32>
    %112 = arith.mulf %111, %105 : vector<4x128xf32>
    %113 = arith.addf %92, %112 : vector<4x128xf32>
    %c36 = arith.constant 36 : index
    %114 = memref.load %arg3[%c36] : memref<72xf32, #tpu.memory_space<smem>>
    %115 = vector.broadcast %114 : f32 to vector<4x128xf32>
    %116 = arith.mulf %115, %105 : vector<4x128xf32>
    %117 = arith.addf %94, %116 : vector<4x128xf32>
    %c54 = arith.constant 54 : index
    %118 = memref.load %arg3[%c54] : memref<72xf32, #tpu.memory_space<smem>>
    %119 = vector.broadcast %118 : f32 to vector<4x128xf32>
    %120 = arith.mulf %119, %105 : vector<4x128xf32>
    %121 = arith.addf %96, %120 : vector<4x128xf32>
    %c16_i32 = arith.constant 16 : i32
    %122 = tpu.dynamic_rotate %60 by %c16_i32 dim 1 : vector<4x128xf32>, i32 -> vector<4x128xf32>
    %c16_i32_48 = arith.constant 16 : i32
    %123 = vector.broadcast %c16_i32_48 : i32 to vector<4x128xi32>
    %124 = arith.cmpi sge, %67, %123 : vector<4x128xi32>
    %125 = vector.extract_strided_slice %122 {offsets = [3, 0], sizes = [1, 128], strides = [1, 1]} : vector<4x128xf32> to vector<1x128xf32>
    %126 = vector.extract_strided_slice %122 {offsets = [0, 0], sizes = [3, 128], strides = [1, 1]} : vector<4x128xf32> to vector<3x128xf32>
    %127 = tpu.concatenate %125, %126 in 0 : vector<1x128xf32>, vector<3x128xf32> -> vector<4x128xf32>
    %128 = arith.select %124, %122, %127 : vector<4x128xi1>, vector<4x128xf32>
    %cst_49 = arith.constant 0.000000e+00 : f32
    %129 = vector.broadcast %cst_49 : f32 to vector<4x128xf32>
    %130 = arith.select %78, %128, %129 : vector<4x128xi1>, vector<4x128xf32>
    %c1_50 = arith.constant 1 : index
    %131 = memref.load %arg3[%c1_50] : memref<72xf32, #tpu.memory_space<smem>>
    %132 = vector.broadcast %131 : f32 to vector<4x128xf32>
    %133 = arith.mulf %132, %130 : vector<4x128xf32>
    %134 = arith.addf %109, %133 : vector<4x128xf32>
    %c19 = arith.constant 19 : index
    %135 = memref.load %arg3[%c19] : memref<72xf32, #tpu.memory_space<smem>>
    %136 = vector.broadcast %135 : f32 to vector<4x128xf32>
    %137 = arith.mulf %136, %130 : vector<4x128xf32>
    %138 = arith.addf %113, %137 : vector<4x128xf32>
    %c37 = arith.constant 37 : index
    %139 = memref.load %arg3[%c37] : memref<72xf32, #tpu.memory_space<smem>>
    %140 = vector.broadcast %139 : f32 to vector<4x128xf32>
    %141 = arith.mulf %140, %130 : vector<4x128xf32>
    %142 = arith.addf %117, %141 : vector<4x128xf32>
    %c55 = arith.constant 55 : index
    %143 = memref.load %arg3[%c55] : memref<72xf32, #tpu.memory_space<smem>>
    %144 = vector.broadcast %143 : f32 to vector<4x128xf32>
    %145 = arith.mulf %144, %130 : vector<4x128xf32>
    %146 = arith.addf %121, %145 : vector<4x128xf32>
    %c15_i32_51 = arith.constant 15 : i32
    %147 = tpu.dynamic_rotate %60 by %c15_i32_51 dim 1 : vector<4x128xf32>, i32 -> vector<4x128xf32>
    %c15_i32_52 = arith.constant 15 : i32
    %148 = vector.broadcast %c15_i32_52 : i32 to vector<4x128xi32>
    %149 = arith.cmpi sge, %67, %148 : vector<4x128xi32>
    %150 = vector.extract_strided_slice %147 {offsets = [3, 0], sizes = [1, 128], strides = [1, 1]} : vector<4x128xf32> to vector<1x128xf32>
    %151 = vector.extract_strided_slice %147 {offsets = [0, 0], sizes = [3, 128], strides = [1, 1]} : vector<4x128xf32> to vector<3x128xf32>
    %152 = tpu.concatenate %150, %151 in 0 : vector<1x128xf32>, vector<3x128xf32> -> vector<4x128xf32>
    %153 = arith.select %149, %147, %152 : vector<4x128xi1>, vector<4x128xf32>
    %cst_53 = arith.constant 0.000000e+00 : f32
    %154 = vector.broadcast %cst_53 : f32 to vector<4x128xf32>
    %155 = arith.select %86, %153, %154 : vector<4x128xi1>, vector<4x128xf32>
    %c2_54 = arith.constant 2 : index
    %156 = memref.load %arg3[%c2_54] : memref<72xf32, #tpu.memory_space<smem>>
    %157 = vector.broadcast %156 : f32 to vector<4x128xf32>
    %158 = arith.mulf %157, %155 : vector<4x128xf32>
    %159 = arith.addf %134, %158 : vector<4x128xf32>
    %c20 = arith.constant 20 : index
    %160 = memref.load %arg3[%c20] : memref<72xf32, #tpu.memory_space<smem>>
    %161 = vector.broadcast %160 : f32 to vector<4x128xf32>
    %162 = arith.mulf %161, %155 : vector<4x128xf32>
    %163 = arith.addf %138, %162 : vector<4x128xf32>
    %c38 = arith.constant 38 : index
    %164 = memref.load %arg3[%c38] : memref<72xf32, #tpu.memory_space<smem>>
    %165 = vector.broadcast %164 : f32 to vector<4x128xf32>
    %166 = arith.mulf %165, %155 : vector<4x128xf32>
    %167 = arith.addf %142, %166 : vector<4x128xf32>
    %c56 = arith.constant 56 : index
    %168 = memref.load %arg3[%c56] : memref<72xf32, #tpu.memory_space<smem>>
    %169 = vector.broadcast %168 : f32 to vector<4x128xf32>
    %170 = arith.mulf %169, %155 : vector<4x128xf32>
    %171 = arith.addf %146, %170 : vector<4x128xf32>
    %c1_i32_55 = arith.constant 1 : i32
    %172 = tpu.dynamic_rotate %60 by %c1_i32_55 dim 1 : vector<4x128xf32>, i32 -> vector<4x128xf32>
    %c1_i32_56 = arith.constant 1 : i32
    %173 = vector.broadcast %c1_i32_56 : i32 to vector<4x128xi32>
    %174 = arith.cmpi sge, %67, %173 : vector<4x128xi32>
    %175 = vector.extract_strided_slice %172 {offsets = [3, 0], sizes = [1, 128], strides = [1, 1]} : vector<4x128xf32> to vector<1x128xf32>
    %176 = vector.extract_strided_slice %172 {offsets = [0, 0], sizes = [3, 128], strides = [1, 1]} : vector<4x128xf32> to vector<3x128xf32>
    %177 = tpu.concatenate %175, %176 in 0 : vector<1x128xf32>, vector<3x128xf32> -> vector<4x128xf32>
    %178 = arith.select %174, %172, %177 : vector<4x128xi1>, vector<4x128xf32>
    %cst_57 = arith.constant 0.000000e+00 : f32
    %179 = vector.broadcast %cst_57 : f32 to vector<4x128xf32>
    %180 = arith.select %82, %178, %179 : vector<4x128xi1>, vector<4x128xf32>
    %c3_58 = arith.constant 3 : index
    %181 = memref.load %arg3[%c3_58] : memref<72xf32, #tpu.memory_space<smem>>
    %182 = vector.broadcast %181 : f32 to vector<4x128xf32>
    %183 = arith.mulf %182, %180 : vector<4x128xf32>
    %184 = arith.addf %159, %183 : vector<4x128xf32>
    %c21 = arith.constant 21 : index
    %185 = memref.load %arg3[%c21] : memref<72xf32, #tpu.memory_space<smem>>
    %186 = vector.broadcast %185 : f32 to vector<4x128xf32>
    %187 = arith.mulf %186, %180 : vector<4x128xf32>
    %188 = arith.addf %163, %187 : vector<4x128xf32>
    %c39 = arith.constant 39 : index
    %189 = memref.load %arg3[%c39] : memref<72xf32, #tpu.memory_space<smem>>
    %190 = vector.broadcast %189 : f32 to vector<4x128xf32>
    %191 = arith.mulf %190, %180 : vector<4x128xf32>
    %192 = arith.addf %167, %191 : vector<4x128xf32>
    %c57 = arith.constant 57 : index
    %193 = memref.load %arg3[%c57] : memref<72xf32, #tpu.memory_space<smem>>
    %194 = vector.broadcast %193 : f32 to vector<4x128xf32>
    %195 = arith.mulf %194, %180 : vector<4x128xf32>
    %196 = arith.addf %171, %195 : vector<4x128xf32>
    %c4_59 = arith.constant 4 : index
    %197 = memref.load %arg3[%c4_59] : memref<72xf32, #tpu.memory_space<smem>>
    %198 = vector.broadcast %197 : f32 to vector<4x128xf32>
    %199 = arith.mulf %198, %60 : vector<4x128xf32>
    %200 = arith.addf %184, %199 : vector<4x128xf32>
    %c22 = arith.constant 22 : index
    %201 = memref.load %arg3[%c22] : memref<72xf32, #tpu.memory_space<smem>>
    %202 = vector.broadcast %201 : f32 to vector<4x128xf32>
    %203 = arith.mulf %202, %60 : vector<4x128xf32>
    %204 = arith.addf %188, %203 : vector<4x128xf32>
    %c40 = arith.constant 40 : index
    %205 = memref.load %arg3[%c40] : memref<72xf32, #tpu.memory_space<smem>>
    %206 = vector.broadcast %205 : f32 to vector<4x128xf32>
    %207 = arith.mulf %206, %60 : vector<4x128xf32>
    %208 = arith.addf %192, %207 : vector<4x128xf32>
    %c58 = arith.constant 58 : index
    %209 = memref.load %arg3[%c58] : memref<72xf32, #tpu.memory_space<smem>>
    %210 = vector.broadcast %209 : f32 to vector<4x128xf32>
    %211 = arith.mulf %210, %60 : vector<4x128xf32>
    %212 = arith.addf %196, %211 : vector<4x128xf32>
    %c127_i32 = arith.constant 127 : i32
    %213 = tpu.dynamic_rotate %60 by %c127_i32 dim 1 : vector<4x128xf32>, i32 -> vector<4x128xf32>
    %c127_i32_60 = arith.constant 127 : i32
    %214 = vector.broadcast %c127_i32_60 : i32 to vector<4x128xi32>
    %215 = arith.cmpi slt, %67, %214 : vector<4x128xi32>
    %216 = vector.extract_strided_slice %213 {offsets = [1, 0], sizes = [3, 128], strides = [1, 1]} : vector<4x128xf32> to vector<3x128xf32>
    %217 = vector.extract_strided_slice %213 {offsets = [0, 0], sizes = [1, 128], strides = [1, 1]} : vector<4x128xf32> to vector<1x128xf32>
    %218 = tpu.concatenate %216, %217 in 0 : vector<3x128xf32>, vector<1x128xf32> -> vector<4x128xf32>
    %219 = arith.select %215, %213, %218 : vector<4x128xi1>, vector<4x128xf32>
    %cst_61 = arith.constant 0.000000e+00 : f32
    %220 = vector.broadcast %cst_61 : f32 to vector<4x128xf32>
    %221 = arith.select %84, %219, %220 : vector<4x128xi1>, vector<4x128xf32>
    %c5_62 = arith.constant 5 : index
    %222 = memref.load %arg3[%c5_62] : memref<72xf32, #tpu.memory_space<smem>>
    %223 = vector.broadcast %222 : f32 to vector<4x128xf32>
    %224 = arith.mulf %223, %221 : vector<4x128xf32>
    %225 = arith.addf %200, %224 : vector<4x128xf32>
    %c23 = arith.constant 23 : index
    %226 = memref.load %arg3[%c23] : memref<72xf32, #tpu.memory_space<smem>>
    %227 = vector.broadcast %226 : f32 to vector<4x128xf32>
    %228 = arith.mulf %227, %221 : vector<4x128xf32>
    %229 = arith.addf %204, %228 : vector<4x128xf32>
    %c41 = arith.constant 41 : index
    %230 = memref.load %arg3[%c41] : memref<72xf32, #tpu.memory_space<smem>>
    %231 = vector.broadcast %230 : f32 to vector<4x128xf32>
    %232 = arith.mulf %231, %221 : vector<4x128xf32>
    %233 = arith.addf %208, %232 : vector<4x128xf32>
    %c59 = arith.constant 59 : index
    %234 = memref.load %arg3[%c59] : memref<72xf32, #tpu.memory_space<smem>>
    %235 = vector.broadcast %234 : f32 to vector<4x128xf32>
    %236 = arith.mulf %235, %221 : vector<4x128xf32>
    %237 = arith.addf %212, %236 : vector<4x128xf32>
    %c113_i32 = arith.constant 113 : i32
    %238 = tpu.dynamic_rotate %60 by %c113_i32 dim 1 : vector<4x128xf32>, i32 -> vector<4x128xf32>
    %c113_i32_63 = arith.constant 113 : i32
    %239 = vector.broadcast %c113_i32_63 : i32 to vector<4x128xi32>
    %240 = arith.cmpi slt, %67, %239 : vector<4x128xi32>
    %241 = vector.extract_strided_slice %238 {offsets = [1, 0], sizes = [3, 128], strides = [1, 1]} : vector<4x128xf32> to vector<3x128xf32>
    %242 = vector.extract_strided_slice %238 {offsets = [0, 0], sizes = [1, 128], strides = [1, 1]} : vector<4x128xf32> to vector<1x128xf32>
    %243 = tpu.concatenate %241, %242 in 0 : vector<3x128xf32>, vector<1x128xf32> -> vector<4x128xf32>
    %244 = arith.select %240, %238, %243 : vector<4x128xi1>, vector<4x128xf32>
    %cst_64 = arith.constant 0.000000e+00 : f32
    %245 = vector.broadcast %cst_64 : f32 to vector<4x128xf32>
    %246 = arith.select %87, %244, %245 : vector<4x128xi1>, vector<4x128xf32>
    %c6_65 = arith.constant 6 : index
    %247 = memref.load %arg3[%c6_65] : memref<72xf32, #tpu.memory_space<smem>>
    %248 = vector.broadcast %247 : f32 to vector<4x128xf32>
    %249 = arith.mulf %248, %246 : vector<4x128xf32>
    %250 = arith.addf %225, %249 : vector<4x128xf32>
    %c24 = arith.constant 24 : index
    %251 = memref.load %arg3[%c24] : memref<72xf32, #tpu.memory_space<smem>>
    %252 = vector.broadcast %251 : f32 to vector<4x128xf32>
    %253 = arith.mulf %252, %246 : vector<4x128xf32>
    %254 = arith.addf %229, %253 : vector<4x128xf32>
    %c42 = arith.constant 42 : index
    %255 = memref.load %arg3[%c42] : memref<72xf32, #tpu.memory_space<smem>>
    %256 = vector.broadcast %255 : f32 to vector<4x128xf32>
    %257 = arith.mulf %256, %246 : vector<4x128xf32>
    %258 = arith.addf %233, %257 : vector<4x128xf32>
    %c60 = arith.constant 60 : index
    %259 = memref.load %arg3[%c60] : memref<72xf32, #tpu.memory_space<smem>>
    %260 = vector.broadcast %259 : f32 to vector<4x128xf32>
    %261 = arith.mulf %260, %246 : vector<4x128xf32>
    %262 = arith.addf %237, %261 : vector<4x128xf32>
    %c112_i32 = arith.constant 112 : i32
    %263 = tpu.dynamic_rotate %60 by %c112_i32 dim 1 : vector<4x128xf32>, i32 -> vector<4x128xf32>
    %c112_i32_66 = arith.constant 112 : i32
    %264 = vector.broadcast %c112_i32_66 : i32 to vector<4x128xi32>
    %265 = arith.cmpi slt, %67, %264 : vector<4x128xi32>
    %266 = vector.extract_strided_slice %263 {offsets = [1, 0], sizes = [3, 128], strides = [1, 1]} : vector<4x128xf32> to vector<3x128xf32>
    %267 = vector.extract_strided_slice %263 {offsets = [0, 0], sizes = [1, 128], strides = [1, 1]} : vector<4x128xf32> to vector<1x128xf32>
    %268 = tpu.concatenate %266, %267 in 0 : vector<3x128xf32>, vector<1x128xf32> -> vector<4x128xf32>
    %269 = arith.select %265, %263, %268 : vector<4x128xi1>, vector<4x128xf32>
    %cst_67 = arith.constant 0.000000e+00 : f32
    %270 = vector.broadcast %cst_67 : f32 to vector<4x128xf32>
    %271 = arith.select %80, %269, %270 : vector<4x128xi1>, vector<4x128xf32>
    %c7_68 = arith.constant 7 : index
    %272 = memref.load %arg3[%c7_68] : memref<72xf32, #tpu.memory_space<smem>>
    %273 = vector.broadcast %272 : f32 to vector<4x128xf32>
    %274 = arith.mulf %273, %271 : vector<4x128xf32>
    %275 = arith.addf %250, %274 : vector<4x128xf32>
    %c25 = arith.constant 25 : index
    %276 = memref.load %arg3[%c25] : memref<72xf32, #tpu.memory_space<smem>>
    %277 = vector.broadcast %276 : f32 to vector<4x128xf32>
    %278 = arith.mulf %277, %271 : vector<4x128xf32>
    %279 = arith.addf %254, %278 : vector<4x128xf32>
    %c43 = arith.constant 43 : index
    %280 = memref.load %arg3[%c43] : memref<72xf32, #tpu.memory_space<smem>>
    %281 = vector.broadcast %280 : f32 to vector<4x128xf32>
    %282 = arith.mulf %281, %271 : vector<4x128xf32>
    %283 = arith.addf %258, %282 : vector<4x128xf32>
    %c61 = arith.constant 61 : index
    %284 = memref.load %arg3[%c61] : memref<72xf32, #tpu.memory_space<smem>>
    %285 = vector.broadcast %284 : f32 to vector<4x128xf32>
    %286 = arith.mulf %285, %271 : vector<4x128xf32>
    %287 = arith.addf %262, %286 : vector<4x128xf32>
    %c111_i32 = arith.constant 111 : i32
    %288 = tpu.dynamic_rotate %60 by %c111_i32 dim 1 : vector<4x128xf32>, i32 -> vector<4x128xf32>
    %c111_i32_69 = arith.constant 111 : i32
    %289 = vector.broadcast %c111_i32_69 : i32 to vector<4x128xi32>
    %290 = arith.cmpi slt, %67, %289 : vector<4x128xi32>
    %291 = vector.extract_strided_slice %288 {offsets = [1, 0], sizes = [3, 128], strides = [1, 1]} : vector<4x128xf32> to vector<3x128xf32>
    %292 = vector.extract_strided_slice %288 {offsets = [0, 0], sizes = [1, 128], strides = [1, 1]} : vector<4x128xf32> to vector<1x128xf32>
    %293 = tpu.concatenate %291, %292 in 0 : vector<3x128xf32>, vector<1x128xf32> -> vector<4x128xf32>
    %294 = arith.select %290, %288, %293 : vector<4x128xi1>, vector<4x128xf32>
    %cst_70 = arith.constant 0.000000e+00 : f32
    %295 = vector.broadcast %cst_70 : f32 to vector<4x128xf32>
    %296 = arith.select %88, %294, %295 : vector<4x128xi1>, vector<4x128xf32>
    %c8 = arith.constant 8 : index
    %297 = memref.load %arg3[%c8] : memref<72xf32, #tpu.memory_space<smem>>
    %298 = vector.broadcast %297 : f32 to vector<4x128xf32>
    %299 = arith.mulf %298, %296 : vector<4x128xf32>
    %300 = arith.addf %275, %299 : vector<4x128xf32>
    %c26 = arith.constant 26 : index
    %301 = memref.load %arg3[%c26] : memref<72xf32, #tpu.memory_space<smem>>
    %302 = vector.broadcast %301 : f32 to vector<4x128xf32>
    %303 = arith.mulf %302, %296 : vector<4x128xf32>
    %304 = arith.addf %279, %303 : vector<4x128xf32>
    %c44 = arith.constant 44 : index
    %305 = memref.load %arg3[%c44] : memref<72xf32, #tpu.memory_space<smem>>
    %306 = vector.broadcast %305 : f32 to vector<4x128xf32>
    %307 = arith.mulf %306, %296 : vector<4x128xf32>
    %308 = arith.addf %283, %307 : vector<4x128xf32>
    %c62 = arith.constant 62 : index
    %309 = memref.load %arg3[%c62] : memref<72xf32, #tpu.memory_space<smem>>
    %310 = vector.broadcast %309 : f32 to vector<4x128xf32>
    %311 = arith.mulf %310, %296 : vector<4x128xf32>
    %312 = arith.addf %287, %311 : vector<4x128xf32>
    %c17_i32_71 = arith.constant 17 : i32
    %313 = tpu.dynamic_rotate %65 by %c17_i32_71 dim 1 : vector<4x128xf32>, i32 -> vector<4x128xf32>
    %c17_i32_72 = arith.constant 17 : i32
    %314 = vector.broadcast %c17_i32_72 : i32 to vector<4x128xi32>
    %315 = arith.cmpi sge, %67, %314 : vector<4x128xi32>
    %316 = vector.extract_strided_slice %313 {offsets = [3, 0], sizes = [1, 128], strides = [1, 1]} : vector<4x128xf32> to vector<1x128xf32>
    %317 = vector.extract_strided_slice %313 {offsets = [0, 0], sizes = [3, 128], strides = [1, 1]} : vector<4x128xf32> to vector<3x128xf32>
    %318 = tpu.concatenate %316, %317 in 0 : vector<1x128xf32>, vector<3x128xf32> -> vector<4x128xf32>
    %319 = arith.select %315, %313, %318 : vector<4x128xi1>, vector<4x128xf32>
    %cst_73 = arith.constant 0.000000e+00 : f32
    %320 = vector.broadcast %cst_73 : f32 to vector<4x128xf32>
    %321 = arith.select %85, %319, %320 : vector<4x128xi1>, vector<4x128xf32>
    %c9 = arith.constant 9 : index
    %322 = memref.load %arg3[%c9] : memref<72xf32, #tpu.memory_space<smem>>
    %323 = vector.broadcast %322 : f32 to vector<4x128xf32>
    %324 = arith.mulf %323, %321 : vector<4x128xf32>
    %325 = arith.addf %300, %324 : vector<4x128xf32>
    %c27 = arith.constant 27 : index
    %326 = memref.load %arg3[%c27] : memref<72xf32, #tpu.memory_space<smem>>
    %327 = vector.broadcast %326 : f32 to vector<4x128xf32>
    %328 = arith.mulf %327, %321 : vector<4x128xf32>
    %329 = arith.addf %304, %328 : vector<4x128xf32>
    %c45 = arith.constant 45 : index
    %330 = memref.load %arg3[%c45] : memref<72xf32, #tpu.memory_space<smem>>
    %331 = vector.broadcast %330 : f32 to vector<4x128xf32>
    %332 = arith.mulf %331, %321 : vector<4x128xf32>
    %333 = arith.addf %308, %332 : vector<4x128xf32>
    %c63 = arith.constant 63 : index
    %334 = memref.load %arg3[%c63] : memref<72xf32, #tpu.memory_space<smem>>
    %335 = vector.broadcast %334 : f32 to vector<4x128xf32>
    %336 = arith.mulf %335, %321 : vector<4x128xf32>
    %337 = arith.addf %312, %336 : vector<4x128xf32>
    %c16_i32_74 = arith.constant 16 : i32
    %338 = tpu.dynamic_rotate %65 by %c16_i32_74 dim 1 : vector<4x128xf32>, i32 -> vector<4x128xf32>
    %c16_i32_75 = arith.constant 16 : i32
    %339 = vector.broadcast %c16_i32_75 : i32 to vector<4x128xi32>
    %340 = arith.cmpi sge, %67, %339 : vector<4x128xi32>
    %341 = vector.extract_strided_slice %338 {offsets = [3, 0], sizes = [1, 128], strides = [1, 1]} : vector<4x128xf32> to vector<1x128xf32>
    %342 = vector.extract_strided_slice %338 {offsets = [0, 0], sizes = [3, 128], strides = [1, 1]} : vector<4x128xf32> to vector<3x128xf32>
    %343 = tpu.concatenate %341, %342 in 0 : vector<1x128xf32>, vector<3x128xf32> -> vector<4x128xf32>
    %344 = arith.select %340, %338, %343 : vector<4x128xi1>, vector<4x128xf32>
    %cst_76 = arith.constant 0.000000e+00 : f32
    %345 = vector.broadcast %cst_76 : f32 to vector<4x128xf32>
    %346 = arith.select %78, %344, %345 : vector<4x128xi1>, vector<4x128xf32>
    %c10 = arith.constant 10 : index
    %347 = memref.load %arg3[%c10] : memref<72xf32, #tpu.memory_space<smem>>
    %348 = vector.broadcast %347 : f32 to vector<4x128xf32>
    %349 = arith.mulf %348, %346 : vector<4x128xf32>
    %350 = arith.addf %325, %349 : vector<4x128xf32>
    %c28 = arith.constant 28 : index
    %351 = memref.load %arg3[%c28] : memref<72xf32, #tpu.memory_space<smem>>
    %352 = vector.broadcast %351 : f32 to vector<4x128xf32>
    %353 = arith.mulf %352, %346 : vector<4x128xf32>
    %354 = arith.addf %329, %353 : vector<4x128xf32>
    %c46 = arith.constant 46 : index
    %355 = memref.load %arg3[%c46] : memref<72xf32, #tpu.memory_space<smem>>
    %356 = vector.broadcast %355 : f32 to vector<4x128xf32>
    %357 = arith.mulf %356, %346 : vector<4x128xf32>
    %358 = arith.addf %333, %357 : vector<4x128xf32>
    %c64 = arith.constant 64 : index
    %359 = memref.load %arg3[%c64] : memref<72xf32, #tpu.memory_space<smem>>
    %360 = vector.broadcast %359 : f32 to vector<4x128xf32>
    %361 = arith.mulf %360, %346 : vector<4x128xf32>
    %362 = arith.addf %337, %361 : vector<4x128xf32>
    %c15_i32_77 = arith.constant 15 : i32
    %363 = tpu.dynamic_rotate %65 by %c15_i32_77 dim 1 : vector<4x128xf32>, i32 -> vector<4x128xf32>
    %c15_i32_78 = arith.constant 15 : i32
    %364 = vector.broadcast %c15_i32_78 : i32 to vector<4x128xi32>
    %365 = arith.cmpi sge, %67, %364 : vector<4x128xi32>
    %366 = vector.extract_strided_slice %363 {offsets = [3, 0], sizes = [1, 128], strides = [1, 1]} : vector<4x128xf32> to vector<1x128xf32>
    %367 = vector.extract_strided_slice %363 {offsets = [0, 0], sizes = [3, 128], strides = [1, 1]} : vector<4x128xf32> to vector<3x128xf32>
    %368 = tpu.concatenate %366, %367 in 0 : vector<1x128xf32>, vector<3x128xf32> -> vector<4x128xf32>
    %369 = arith.select %365, %363, %368 : vector<4x128xi1>, vector<4x128xf32>
    %cst_79 = arith.constant 0.000000e+00 : f32
    %370 = vector.broadcast %cst_79 : f32 to vector<4x128xf32>
    %371 = arith.select %86, %369, %370 : vector<4x128xi1>, vector<4x128xf32>
    %c11 = arith.constant 11 : index
    %372 = memref.load %arg3[%c11] : memref<72xf32, #tpu.memory_space<smem>>
    %373 = vector.broadcast %372 : f32 to vector<4x128xf32>
    %374 = arith.mulf %373, %371 : vector<4x128xf32>
    %375 = arith.addf %350, %374 : vector<4x128xf32>
    %c29 = arith.constant 29 : index
    %376 = memref.load %arg3[%c29] : memref<72xf32, #tpu.memory_space<smem>>
    %377 = vector.broadcast %376 : f32 to vector<4x128xf32>
    %378 = arith.mulf %377, %371 : vector<4x128xf32>
    %379 = arith.addf %354, %378 : vector<4x128xf32>
    %c47 = arith.constant 47 : index
    %380 = memref.load %arg3[%c47] : memref<72xf32, #tpu.memory_space<smem>>
    %381 = vector.broadcast %380 : f32 to vector<4x128xf32>
    %382 = arith.mulf %381, %371 : vector<4x128xf32>
    %383 = arith.addf %358, %382 : vector<4x128xf32>
    %c65 = arith.constant 65 : index
    %384 = memref.load %arg3[%c65] : memref<72xf32, #tpu.memory_space<smem>>
    %385 = vector.broadcast %384 : f32 to vector<4x128xf32>
    %386 = arith.mulf %385, %371 : vector<4x128xf32>
    %387 = arith.addf %362, %386 : vector<4x128xf32>
    %c1_i32_80 = arith.constant 1 : i32
    %388 = tpu.dynamic_rotate %65 by %c1_i32_80 dim 1 : vector<4x128xf32>, i32 -> vector<4x128xf32>
    %c1_i32_81 = arith.constant 1 : i32
    %389 = vector.broadcast %c1_i32_81 : i32 to vector<4x128xi32>
    %390 = arith.cmpi sge, %67, %389 : vector<4x128xi32>
    %391 = vector.extract_strided_slice %388 {offsets = [3, 0], sizes = [1, 128], strides = [1, 1]} : vector<4x128xf32> to vector<1x128xf32>
    %392 = vector.extract_strided_slice %388 {offsets = [0, 0], sizes = [3, 128], strides = [1, 1]} : vector<4x128xf32> to vector<3x128xf32>
    %393 = tpu.concatenate %391, %392 in 0 : vector<1x128xf32>, vector<3x128xf32> -> vector<4x128xf32>
    %394 = arith.select %390, %388, %393 : vector<4x128xi1>, vector<4x128xf32>
    %cst_82 = arith.constant 0.000000e+00 : f32
    %395 = vector.broadcast %cst_82 : f32 to vector<4x128xf32>
    %396 = arith.select %82, %394, %395 : vector<4x128xi1>, vector<4x128xf32>
    %c12 = arith.constant 12 : index
    %397 = memref.load %arg3[%c12] : memref<72xf32, #tpu.memory_space<smem>>
    %398 = vector.broadcast %397 : f32 to vector<4x128xf32>
    %399 = arith.mulf %398, %396 : vector<4x128xf32>
    %400 = arith.addf %375, %399 : vector<4x128xf32>
    %c30 = arith.constant 30 : index
    %401 = memref.load %arg3[%c30] : memref<72xf32, #tpu.memory_space<smem>>
    %402 = vector.broadcast %401 : f32 to vector<4x128xf32>
    %403 = arith.mulf %402, %396 : vector<4x128xf32>
    %404 = arith.addf %379, %403 : vector<4x128xf32>
    %c48 = arith.constant 48 : index
    %405 = memref.load %arg3[%c48] : memref<72xf32, #tpu.memory_space<smem>>
    %406 = vector.broadcast %405 : f32 to vector<4x128xf32>
    %407 = arith.mulf %406, %396 : vector<4x128xf32>
    %408 = arith.addf %383, %407 : vector<4x128xf32>
    %c66 = arith.constant 66 : index
    %409 = memref.load %arg3[%c66] : memref<72xf32, #tpu.memory_space<smem>>
    %410 = vector.broadcast %409 : f32 to vector<4x128xf32>
    %411 = arith.mulf %410, %396 : vector<4x128xf32>
    %412 = arith.addf %387, %411 : vector<4x128xf32>
    %c13 = arith.constant 13 : index
    %413 = memref.load %arg3[%c13] : memref<72xf32, #tpu.memory_space<smem>>
    %414 = vector.broadcast %413 : f32 to vector<4x128xf32>
    %415 = arith.mulf %414, %65 : vector<4x128xf32>
    %416 = arith.addf %400, %415 : vector<4x128xf32>
    %c31 = arith.constant 31 : index
    %417 = memref.load %arg3[%c31] : memref<72xf32, #tpu.memory_space<smem>>
    %418 = vector.broadcast %417 : f32 to vector<4x128xf32>
    %419 = arith.mulf %418, %65 : vector<4x128xf32>
    %420 = arith.addf %404, %419 : vector<4x128xf32>
    %c49 = arith.constant 49 : index
    %421 = memref.load %arg3[%c49] : memref<72xf32, #tpu.memory_space<smem>>
    %422 = vector.broadcast %421 : f32 to vector<4x128xf32>
    %423 = arith.mulf %422, %65 : vector<4x128xf32>
    %424 = arith.addf %408, %423 : vector<4x128xf32>
    %c67 = arith.constant 67 : index
    %425 = memref.load %arg3[%c67] : memref<72xf32, #tpu.memory_space<smem>>
    %426 = vector.broadcast %425 : f32 to vector<4x128xf32>
    %427 = arith.mulf %426, %65 : vector<4x128xf32>
    %428 = arith.addf %412, %427 : vector<4x128xf32>
    %c127_i32_83 = arith.constant 127 : i32
    %429 = tpu.dynamic_rotate %65 by %c127_i32_83 dim 1 : vector<4x128xf32>, i32 -> vector<4x128xf32>
    %c127_i32_84 = arith.constant 127 : i32
    %430 = vector.broadcast %c127_i32_84 : i32 to vector<4x128xi32>
    %431 = arith.cmpi slt, %67, %430 : vector<4x128xi32>
    %432 = vector.extract_strided_slice %429 {offsets = [1, 0], sizes = [3, 128], strides = [1, 1]} : vector<4x128xf32> to vector<3x128xf32>
    %433 = vector.extract_strided_slice %429 {offsets = [0, 0], sizes = [1, 128], strides = [1, 1]} : vector<4x128xf32> to vector<1x128xf32>
    %434 = tpu.concatenate %432, %433 in 0 : vector<3x128xf32>, vector<1x128xf32> -> vector<4x128xf32>
    %435 = arith.select %431, %429, %434 : vector<4x128xi1>, vector<4x128xf32>
    %cst_85 = arith.constant 0.000000e+00 : f32
    %436 = vector.broadcast %cst_85 : f32 to vector<4x128xf32>
    %437 = arith.select %84, %435, %436 : vector<4x128xi1>, vector<4x128xf32>
    %c14 = arith.constant 14 : index
    %438 = memref.load %arg3[%c14] : memref<72xf32, #tpu.memory_space<smem>>
    %439 = vector.broadcast %438 : f32 to vector<4x128xf32>
    %440 = arith.mulf %439, %437 : vector<4x128xf32>
    %441 = arith.addf %416, %440 : vector<4x128xf32>
    %c32 = arith.constant 32 : index
    %442 = memref.load %arg3[%c32] : memref<72xf32, #tpu.memory_space<smem>>
    %443 = vector.broadcast %442 : f32 to vector<4x128xf32>
    %444 = arith.mulf %443, %437 : vector<4x128xf32>
    %445 = arith.addf %420, %444 : vector<4x128xf32>
    %c50 = arith.constant 50 : index
    %446 = memref.load %arg3[%c50] : memref<72xf32, #tpu.memory_space<smem>>
    %447 = vector.broadcast %446 : f32 to vector<4x128xf32>
    %448 = arith.mulf %447, %437 : vector<4x128xf32>
    %449 = arith.addf %424, %448 : vector<4x128xf32>
    %c68 = arith.constant 68 : index
    %450 = memref.load %arg3[%c68] : memref<72xf32, #tpu.memory_space<smem>>
    %451 = vector.broadcast %450 : f32 to vector<4x128xf32>
    %452 = arith.mulf %451, %437 : vector<4x128xf32>
    %453 = arith.addf %428, %452 : vector<4x128xf32>
    %c113_i32_86 = arith.constant 113 : i32
    %454 = tpu.dynamic_rotate %65 by %c113_i32_86 dim 1 : vector<4x128xf32>, i32 -> vector<4x128xf32>
    %c113_i32_87 = arith.constant 113 : i32
    %455 = vector.broadcast %c113_i32_87 : i32 to vector<4x128xi32>
    %456 = arith.cmpi slt, %67, %455 : vector<4x128xi32>
    %457 = vector.extract_strided_slice %454 {offsets = [1, 0], sizes = [3, 128], strides = [1, 1]} : vector<4x128xf32> to vector<3x128xf32>
    %458 = vector.extract_strided_slice %454 {offsets = [0, 0], sizes = [1, 128], strides = [1, 1]} : vector<4x128xf32> to vector<1x128xf32>
    %459 = tpu.concatenate %457, %458 in 0 : vector<3x128xf32>, vector<1x128xf32> -> vector<4x128xf32>
    %460 = arith.select %456, %454, %459 : vector<4x128xi1>, vector<4x128xf32>
    %cst_88 = arith.constant 0.000000e+00 : f32
    %461 = vector.broadcast %cst_88 : f32 to vector<4x128xf32>
    %462 = arith.select %87, %460, %461 : vector<4x128xi1>, vector<4x128xf32>
    %c15 = arith.constant 15 : index
    %463 = memref.load %arg3[%c15] : memref<72xf32, #tpu.memory_space<smem>>
    %464 = vector.broadcast %463 : f32 to vector<4x128xf32>
    %465 = arith.mulf %464, %462 : vector<4x128xf32>
    %466 = arith.addf %441, %465 : vector<4x128xf32>
    %c33 = arith.constant 33 : index
    %467 = memref.load %arg3[%c33] : memref<72xf32, #tpu.memory_space<smem>>
    %468 = vector.broadcast %467 : f32 to vector<4x128xf32>
    %469 = arith.mulf %468, %462 : vector<4x128xf32>
    %470 = arith.addf %445, %469 : vector<4x128xf32>
    %c51 = arith.constant 51 : index
    %471 = memref.load %arg3[%c51] : memref<72xf32, #tpu.memory_space<smem>>
    %472 = vector.broadcast %471 : f32 to vector<4x128xf32>
    %473 = arith.mulf %472, %462 : vector<4x128xf32>
    %474 = arith.addf %449, %473 : vector<4x128xf32>
    %c69 = arith.constant 69 : index
    %475 = memref.load %arg3[%c69] : memref<72xf32, #tpu.memory_space<smem>>
    %476 = vector.broadcast %475 : f32 to vector<4x128xf32>
    %477 = arith.mulf %476, %462 : vector<4x128xf32>
    %478 = arith.addf %453, %477 : vector<4x128xf32>
    %c112_i32_89 = arith.constant 112 : i32
    %479 = tpu.dynamic_rotate %65 by %c112_i32_89 dim 1 : vector<4x128xf32>, i32 -> vector<4x128xf32>
    %c112_i32_90 = arith.constant 112 : i32
    %480 = vector.broadcast %c112_i32_90 : i32 to vector<4x128xi32>
    %481 = arith.cmpi slt, %67, %480 : vector<4x128xi32>
    %482 = vector.extract_strided_slice %479 {offsets = [1, 0], sizes = [3, 128], strides = [1, 1]} : vector<4x128xf32> to vector<3x128xf32>
    %483 = vector.extract_strided_slice %479 {offsets = [0, 0], sizes = [1, 128], strides = [1, 1]} : vector<4x128xf32> to vector<1x128xf32>
    %484 = tpu.concatenate %482, %483 in 0 : vector<3x128xf32>, vector<1x128xf32> -> vector<4x128xf32>
    %485 = arith.select %481, %479, %484 : vector<4x128xi1>, vector<4x128xf32>
    %cst_91 = arith.constant 0.000000e+00 : f32
    %486 = vector.broadcast %cst_91 : f32 to vector<4x128xf32>
    %487 = arith.select %80, %485, %486 : vector<4x128xi1>, vector<4x128xf32>
    %c16 = arith.constant 16 : index
    %488 = memref.load %arg3[%c16] : memref<72xf32, #tpu.memory_space<smem>>
    %489 = vector.broadcast %488 : f32 to vector<4x128xf32>
    %490 = arith.mulf %489, %487 : vector<4x128xf32>
    %491 = arith.addf %466, %490 : vector<4x128xf32>
    %c34 = arith.constant 34 : index
    %492 = memref.load %arg3[%c34] : memref<72xf32, #tpu.memory_space<smem>>
    %493 = vector.broadcast %492 : f32 to vector<4x128xf32>
    %494 = arith.mulf %493, %487 : vector<4x128xf32>
    %495 = arith.addf %470, %494 : vector<4x128xf32>
    %c52 = arith.constant 52 : index
    %496 = memref.load %arg3[%c52] : memref<72xf32, #tpu.memory_space<smem>>
    %497 = vector.broadcast %496 : f32 to vector<4x128xf32>
    %498 = arith.mulf %497, %487 : vector<4x128xf32>
    %499 = arith.addf %474, %498 : vector<4x128xf32>
    %c70 = arith.constant 70 : index
    %500 = memref.load %arg3[%c70] : memref<72xf32, #tpu.memory_space<smem>>
    %501 = vector.broadcast %500 : f32 to vector<4x128xf32>
    %502 = arith.mulf %501, %487 : vector<4x128xf32>
    %503 = arith.addf %478, %502 : vector<4x128xf32>
    %c111_i32_92 = arith.constant 111 : i32
    %504 = tpu.dynamic_rotate %65 by %c111_i32_92 dim 1 : vector<4x128xf32>, i32 -> vector<4x128xf32>
    %c111_i32_93 = arith.constant 111 : i32
    %505 = vector.broadcast %c111_i32_93 : i32 to vector<4x128xi32>
    %506 = arith.cmpi slt, %67, %505 : vector<4x128xi32>
    %507 = vector.extract_strided_slice %504 {offsets = [1, 0], sizes = [3, 128], strides = [1, 1]} : vector<4x128xf32> to vector<3x128xf32>
    %508 = vector.extract_strided_slice %504 {offsets = [0, 0], sizes = [1, 128], strides = [1, 1]} : vector<4x128xf32> to vector<1x128xf32>
    %509 = tpu.concatenate %507, %508 in 0 : vector<3x128xf32>, vector<1x128xf32> -> vector<4x128xf32>
    %510 = arith.select %506, %504, %509 : vector<4x128xi1>, vector<4x128xf32>
    %cst_94 = arith.constant 0.000000e+00 : f32
    %511 = vector.broadcast %cst_94 : f32 to vector<4x128xf32>
    %512 = arith.select %88, %510, %511 : vector<4x128xi1>, vector<4x128xf32>
    %c17 = arith.constant 17 : index
    %513 = memref.load %arg3[%c17] : memref<72xf32, #tpu.memory_space<smem>>
    %514 = vector.broadcast %513 : f32 to vector<4x128xf32>
    %515 = arith.mulf %514, %512 : vector<4x128xf32>
    %516 = arith.addf %491, %515 : vector<4x128xf32>
    %c35 = arith.constant 35 : index
    %517 = memref.load %arg3[%c35] : memref<72xf32, #tpu.memory_space<smem>>
    %518 = vector.broadcast %517 : f32 to vector<4x128xf32>
    %519 = arith.mulf %518, %512 : vector<4x128xf32>
    %520 = arith.addf %495, %519 : vector<4x128xf32>
    %c53 = arith.constant 53 : index
    %521 = memref.load %arg3[%c53] : memref<72xf32, #tpu.memory_space<smem>>
    %522 = vector.broadcast %521 : f32 to vector<4x128xf32>
    %523 = arith.mulf %522, %512 : vector<4x128xf32>
    %524 = arith.addf %499, %523 : vector<4x128xf32>
    %c71 = arith.constant 71 : index
    %525 = memref.load %arg3[%c71] : memref<72xf32, #tpu.memory_space<smem>>
    %526 = vector.broadcast %525 : f32 to vector<4x128xf32>
    %527 = arith.mulf %526, %512 : vector<4x128xf32>
    %528 = arith.addf %503, %527 : vector<4x128xf32>
    %c0_95 = arith.constant 0 : index
    %c0_96 = arith.constant 0 : index
    %c0_97 = arith.constant 0 : index
    %c0_98 = arith.constant 0 : index
    %529 = vector.load %arg5[%c0_95, %c0_96, %c0_97, %c0_98] : memref<2x4x2x128xf32, #tpu.memory_space<vmem>>, vector<1x1x2x128xf32>
    %530 = vector.shape_cast %529 : vector<1x1x2x128xf32> to vector<2x128xf32>
    %c1_99 = arith.constant 1 : index
    %c0_100 = arith.constant 0 : index
    %c0_101 = arith.constant 0 : index
    %c0_102 = arith.constant 0 : index
    %531 = vector.load %arg5[%c1_99, %c0_100, %c0_101, %c0_102] : memref<2x4x2x128xf32, #tpu.memory_space<vmem>>, vector<1x1x2x128xf32>
    %532 = vector.shape_cast %531 : vector<1x1x2x128xf32> to vector<2x128xf32>
    %533 = tpu.concatenate %530, %532 in 0 : vector<2x128xf32>, vector<2x128xf32> -> vector<4x128xf32>
    %cst_103 = arith.constant 0.000000e+00 : f32
    %534 = vector.broadcast %cst_103 : f32 to vector<4x128xf32>
    %535 = arith.cmpf ogt, %516, %534 : vector<4x128xf32>
    %cst_104 = arith.constant 1.000000e-01 : f32
    %536 = vector.broadcast %cst_104 : f32 to vector<4x128xf32>
    %537 = arith.mulf %536, %516 : vector<4x128xf32>
    %538 = arith.select %535, %516, %537 : vector<4x128xi1>, vector<4x128xf32>
    %539 = arith.addf %533, %538 : vector<4x128xf32>
    %540 = vector.extract_strided_slice %539 {offsets = [0, 0], sizes = [2, 128], strides = [1, 1]} : vector<4x128xf32> to vector<2x128xf32>
    %c0_105 = arith.constant 0 : index
    %c0_106 = arith.constant 0 : index
    %c0_107 = arith.constant 0 : index
    %c0_108 = arith.constant 0 : index
    %541 = vector.load %arg6[%c0_105, %c0_106, %c0_107, %c0_108] : memref<2x4x2x128xf32, #tpu.memory_space<vmem>>, vector<1x1x2x128xf32>
    %542 = vector.shape_cast %541 : vector<1x1x2x128xf32> to vector<2x128xf32>
    %543 = vector.shape_cast %540 : vector<2x128xf32> to vector<1x1x2x128xf32>
    tpu.vector_store %arg6[%c0_105, %c0_106, %c0_107, %c0_108], %543 {strides = array<i32>} : memref<2x4x2x128xf32, #tpu.memory_space<vmem>>, vector<1x1x2x128xf32>,
    %544 = vector.extract_strided_slice %539 {offsets = [2, 0], sizes = [2, 128], strides = [1, 1]} : vector<4x128xf32> to vector<2x128xf32>
    %c1_109 = arith.constant 1 : index
    %c0_110 = arith.constant 0 : index
    %c0_111 = arith.constant 0 : index
    %c0_112 = arith.constant 0 : index
    %545 = vector.load %arg6[%c1_109, %c0_110, %c0_111, %c0_112] : memref<2x4x2x128xf32, #tpu.memory_space<vmem>>, vector<1x1x2x128xf32>
    %546 = vector.shape_cast %545 : vector<1x1x2x128xf32> to vector<2x128xf32>
    %547 = vector.shape_cast %544 : vector<2x128xf32> to vector<1x1x2x128xf32>
    tpu.vector_store %arg6[%c1_109, %c0_110, %c0_111, %c0_112], %547 {strides = array<i32>} : memref<2x4x2x128xf32, #tpu.memory_space<vmem>>, vector<1x1x2x128xf32>,
    %c0_113 = arith.constant 0 : index
    %c1_114 = arith.constant 1 : index
    %c0_115 = arith.constant 0 : index
    %c0_116 = arith.constant 0 : index
    %548 = vector.load %arg5[%c0_113, %c1_114, %c0_115, %c0_116] : memref<2x4x2x128xf32, #tpu.memory_space<vmem>>, vector<1x1x2x128xf32>
    %549 = vector.shape_cast %548 : vector<1x1x2x128xf32> to vector<2x128xf32>
    %c1_117 = arith.constant 1 : index
    %c1_118 = arith.constant 1 : index
    %c0_119 = arith.constant 0 : index
    %c0_120 = arith.constant 0 : index
    %550 = vector.load %arg5[%c1_117, %c1_118, %c0_119, %c0_120] : memref<2x4x2x128xf32, #tpu.memory_space<vmem>>, vector<1x1x2x128xf32>
    %551 = vector.shape_cast %550 : vector<1x1x2x128xf32> to vector<2x128xf32>
    %552 = tpu.concatenate %549, %551 in 0 : vector<2x128xf32>, vector<2x128xf32> -> vector<4x128xf32>
    %cst_121 = arith.constant 0.000000e+00 : f32
    %553 = vector.broadcast %cst_121 : f32 to vector<4x128xf32>
    %554 = arith.cmpf ogt, %520, %553 : vector<4x128xf32>
    %cst_122 = arith.constant 1.000000e-01 : f32
    %555 = vector.broadcast %cst_122 : f32 to vector<4x128xf32>
    %556 = arith.mulf %555, %520 : vector<4x128xf32>
    %557 = arith.select %554, %520, %556 : vector<4x128xi1>, vector<4x128xf32>
    %558 = arith.addf %552, %557 : vector<4x128xf32>
    %559 = vector.extract_strided_slice %558 {offsets = [0, 0], sizes = [2, 128], strides = [1, 1]} : vector<4x128xf32> to vector<2x128xf32>
    %c0_123 = arith.constant 0 : index
    %c1_124 = arith.constant 1 : index
    %c0_125 = arith.constant 0 : index
    %c0_126 = arith.constant 0 : index
    %560 = vector.load %arg6[%c0_123, %c1_124, %c0_125, %c0_126] : memref<2x4x2x128xf32, #tpu.memory_space<vmem>>, vector<1x1x2x128xf32>
    %561 = vector.shape_cast %560 : vector<1x1x2x128xf32> to vector<2x128xf32>
    %562 = vector.shape_cast %559 : vector<2x128xf32> to vector<1x1x2x128xf32>
    tpu.vector_store %arg6[%c0_123, %c1_124, %c0_125, %c0_126], %562 {strides = array<i32>} : memref<2x4x2x128xf32, #tpu.memory_space<vmem>>, vector<1x1x2x128xf32>,
    %563 = vector.extract_strided_slice %558 {offsets = [2, 0], sizes = [2, 128], strides = [1, 1]} : vector<4x128xf32> to vector<2x128xf32>
    %c1_127 = arith.constant 1 : index
    %c1_128 = arith.constant 1 : index
    %c0_129 = arith.constant 0 : index
    %c0_130 = arith.constant 0 : index
    %564 = vector.load %arg6[%c1_127, %c1_128, %c0_129, %c0_130] : memref<2x4x2x128xf32, #tpu.memory_space<vmem>>, vector<1x1x2x128xf32>
    %565 = vector.shape_cast %564 : vector<1x1x2x128xf32> to vector<2x128xf32>
    %566 = vector.shape_cast %563 : vector<2x128xf32> to vector<1x1x2x128xf32>
    tpu.vector_store %arg6[%c1_127, %c1_128, %c0_129, %c0_130], %566 {strides = array<i32>} : memref<2x4x2x128xf32, #tpu.memory_space<vmem>>, vector<1x1x2x128xf32>,
    %c0_131 = arith.constant 0 : index
    %c2_132 = arith.constant 2 : index
    %c0_133 = arith.constant 0 : index
    %c0_134 = arith.constant 0 : index
    %567 = vector.load %arg5[%c0_131, %c2_132, %c0_133, %c0_134] : memref<2x4x2x128xf32, #tpu.memory_space<vmem>>, vector<1x1x2x128xf32>
    %568 = vector.shape_cast %567 : vector<1x1x2x128xf32> to vector<2x128xf32>
    %c1_135 = arith.constant 1 : index
    %c2_136 = arith.constant 2 : index
    %c0_137 = arith.constant 0 : index
    %c0_138 = arith.constant 0 : index
    %569 = vector.load %arg5[%c1_135, %c2_136, %c0_137, %c0_138] : memref<2x4x2x128xf32, #tpu.memory_space<vmem>>, vector<1x1x2x128xf32>
    %570 = vector.shape_cast %569 : vector<1x1x2x128xf32> to vector<2x128xf32>
    %571 = tpu.concatenate %568, %570 in 0 : vector<2x128xf32>, vector<2x128xf32> -> vector<4x128xf32>
    %cst_139 = arith.constant 0.000000e+00 : f32
    %572 = vector.broadcast %cst_139 : f32 to vector<4x128xf32>
    %573 = arith.cmpf ogt, %524, %572 : vector<4x128xf32>
    %cst_140 = arith.constant 1.000000e-01 : f32
    %574 = vector.broadcast %cst_140 : f32 to vector<4x128xf32>
    %575 = arith.mulf %574, %524 : vector<4x128xf32>
    %576 = arith.select %573, %524, %575 : vector<4x128xi1>, vector<4x128xf32>
    %577 = arith.addf %571, %576 : vector<4x128xf32>
    %578 = vector.extract_strided_slice %577 {offsets = [0, 0], sizes = [2, 128], strides = [1, 1]} : vector<4x128xf32> to vector<2x128xf32>
    %c0_141 = arith.constant 0 : index
    %c2_142 = arith.constant 2 : index
    %c0_143 = arith.constant 0 : index
    %c0_144 = arith.constant 0 : index
    %579 = vector.load %arg6[%c0_141, %c2_142, %c0_143, %c0_144] : memref<2x4x2x128xf32, #tpu.memory_space<vmem>>, vector<1x1x2x128xf32>
    %580 = vector.shape_cast %579 : vector<1x1x2x128xf32> to vector<2x128xf32>
    %581 = vector.shape_cast %578 : vector<2x128xf32> to vector<1x1x2x128xf32>
    tpu.vector_store %arg6[%c0_141, %c2_142, %c0_143, %c0_144], %581 {strides = array<i32>} : memref<2x4x2x128xf32, #tpu.memory_space<vmem>>, vector<1x1x2x128xf32>,
    %582 = vector.extract_strided_slice %577 {offsets = [2, 0], sizes = [2, 128], strides = [1, 1]} : vector<4x128xf32> to vector<2x128xf32>
    %c1_145 = arith.constant 1 : index
    %c2_146 = arith.constant 2 : index
    %c0_147 = arith.constant 0 : index
    %c0_148 = arith.constant 0 : index
    %583 = vector.load %arg6[%c1_145, %c2_146, %c0_147, %c0_148] : memref<2x4x2x128xf32, #tpu.memory_space<vmem>>, vector<1x1x2x128xf32>
    %584 = vector.shape_cast %583 : vector<1x1x2x128xf32> to vector<2x128xf32>
    %585 = vector.shape_cast %582 : vector<2x128xf32> to vector<1x1x2x128xf32>
    tpu.vector_store %arg6[%c1_145, %c2_146, %c0_147, %c0_148], %585 {strides = array<i32>} : memref<2x4x2x128xf32, #tpu.memory_space<vmem>>, vector<1x1x2x128xf32>,
    %c0_149 = arith.constant 0 : index
    %c3_150 = arith.constant 3 : index
    %c0_151 = arith.constant 0 : index
    %c0_152 = arith.constant 0 : index
    %586 = vector.load %arg5[%c0_149, %c3_150, %c0_151, %c0_152] : memref<2x4x2x128xf32, #tpu.memory_space<vmem>>, vector<1x1x2x128xf32>
    %587 = vector.shape_cast %586 : vector<1x1x2x128xf32> to vector<2x128xf32>
    %c1_153 = arith.constant 1 : index
    %c3_154 = arith.constant 3 : index
    %c0_155 = arith.constant 0 : index
    %c0_156 = arith.constant 0 : index
    %588 = vector.load %arg5[%c1_153, %c3_154, %c0_155, %c0_156] : memref<2x4x2x128xf32, #tpu.memory_space<vmem>>, vector<1x1x2x128xf32>
    %589 = vector.shape_cast %588 : vector<1x1x2x128xf32> to vector<2x128xf32>
    %590 = tpu.concatenate %587, %589 in 0 : vector<2x128xf32>, vector<2x128xf32> -> vector<4x128xf32>
    %cst_157 = arith.constant 0.000000e+00 : f32
    %591 = vector.broadcast %cst_157 : f32 to vector<4x128xf32>
    %592 = arith.cmpf ogt, %528, %591 : vector<4x128xf32>
    %cst_158 = arith.constant 1.000000e-01 : f32
    %593 = vector.broadcast %cst_158 : f32 to vector<4x128xf32>
    %594 = arith.mulf %593, %528 : vector<4x128xf32>
    %595 = arith.select %592, %528, %594 : vector<4x128xi1>, vector<4x128xf32>
    %596 = arith.addf %590, %595 : vector<4x128xf32>
    %597 = vector.extract_strided_slice %596 {offsets = [0, 0], sizes = [2, 128], strides = [1, 1]} : vector<4x128xf32> to vector<2x128xf32>
    %c0_159 = arith.constant 0 : index
    %c3_160 = arith.constant 3 : index
    %c0_161 = arith.constant 0 : index
    %c0_162 = arith.constant 0 : index
    %598 = vector.load %arg6[%c0_159, %c3_160, %c0_161, %c0_162] : memref<2x4x2x128xf32, #tpu.memory_space<vmem>>, vector<1x1x2x128xf32>
    %599 = vector.shape_cast %598 : vector<1x1x2x128xf32> to vector<2x128xf32>
    %600 = vector.shape_cast %597 : vector<2x128xf32> to vector<1x1x2x128xf32>
    tpu.vector_store %arg6[%c0_159, %c3_160, %c0_161, %c0_162], %600 {strides = array<i32>} : memref<2x4x2x128xf32, #tpu.memory_space<vmem>>, vector<1x1x2x128xf32>,
    %601 = vector.extract_strided_slice %596 {offsets = [2, 0], sizes = [2, 128], strides = [1, 1]} : vector<4x128xf32> to vector<2x128xf32>
    %c1_163 = arith.constant 1 : index
    %c3_164 = arith.constant 3 : index
    %c0_165 = arith.constant 0 : index
    %c0_166 = arith.constant 0 : index
    %602 = vector.load %arg6[%c1_163, %c3_164, %c0_165, %c0_166] : memref<2x4x2x128xf32, #tpu.memory_space<vmem>>, vector<1x1x2x128xf32>
    %603 = vector.shape_cast %602 : vector<1x1x2x128xf32> to vector<2x128xf32>
    %604 = vector.shape_cast %601 : vector<2x128xf32> to vector<1x1x2x128xf32>
    tpu.vector_store %arg6[%c1_163, %c3_164, %c0_165, %c0_166], %604 {strides = array<i32>} : memref<2x4x2x128xf32, #tpu.memory_space<vmem>>, vector<1x1x2x128xf32>,
    return
  }
  func.func @transform_0(%arg0: i32) -> i32 {
    %c0_i32 = arith.constant 0 : i32
    %c0_i32_0 = arith.constant 0 : i32
    return %c0_i32 : i32
  }
  func.func @transform_1(%arg0: i32) -> i32 {
    %c0_i32 = arith.constant 0 : i32
    %c0_i32_0 = arith.constant 0 : i32
    return %c0_i32 : i32
  }
  func.func @transform_2(%arg0: i32) -> i32 {
    %c0_i32 = arith.constant 0 : i32
    %c0_i32_0 = arith.constant 0 : i32
    return %c0_i32 : i32
  }
  func.func @transform_3(%arg0: i32) -> i32 {
    %c0_i32 = arith.constant 0 : i32
    %c0_i32_0 = arith.constant 0 : i32
    return %c0_i32 : i32
  }
  func.func @transform_4(%arg0: i32) -> (i32, i32, i32, i32) {
    %c0_i32 = arith.constant 0 : i32
    %c0_i32_0 = arith.constant 0 : i32
    %c0_i32_1 = arith.constant 0 : i32
    %c0_i32_2 = arith.constant 0 : i32
    %c0_i32_3 = arith.constant 0 : i32
    return %c0_i32, %c0_i32_0, %c0_i32_1, %c0_i32_2 : i32, i32, i32, i32
  }
  func.func @transform_5(%arg0: i32) -> (i32, i32, i32, i32) {
    %c0_i32 = arith.constant 0 : i32
    %c0_i32_0 = arith.constant 0 : i32
    %c0_i32_1 = arith.constant 0 : i32
    %c0_i32_2 = arith.constant 0 : i32
    %c0_i32_3 = arith.constant 0 : i32
    return %c0_i32, %c0_i32_0, %c0_i32_1, %c0_i32_2 : i32, i32, i32, i32
  }
}

</mosaic_0001>

<llo_original>
// kernel: tpu_custom_call.1
$region0: #{tpu_custom_call.1}
  #allocation0 [shape = 'u32[]', space=smem, size = 0x4, offset = 0x4, fixed_abs, tag = 'smem constant byte address 0x4 - core index']
  #allocation1 [shape = 'u32[144,128]{1,0:T(1,128)}', space=vmem, size = 0x12000, scoped, tag = 'internal scratch']
  %s0 = inlined_call_operand.hbm [shape: f32[8], index: 0, kind: input, shape index: {}]
  %s1 = inlined_call_operand.vmem [shape: f32[2], index: 1, kind: input, shape index: {}]
  %s2 = inlined_call_operand.vmem [shape: f32[72], index: 2, kind: input, shape index: {}]
  %s3 = inlined_call_operand.vmem [shape: f32[4], index: 3, kind: input, shape index: {}]
  %s4 = inlined_call_operand.hbm [shape: f32[2,4,2,128], index: 4, kind: input, shape index: {}]
  %s5 = inlined_call_operand.hbm [shape: f32[2,4,2,128], index: 5, kind: output, shape index: {}]
  %s6 = sld [smem:[#allocation0]]
  $region50: #{tpu_custom_call.1} parent=0
    _
  %s8 = ssub.s32 1, %s6
  %s9 = scalar_select 0, %s8, %s6
  $region1: #{tpu_custom_call.1} parent=0
    #allocation2 [shape = 'u8[512]{0}', space=smem, size = 0x200, scoped, tag = 'input window, operand 0, single buffered']
    #allocation3 [shape = 's32[1]{0}', space=sflag, size = 0x4, scoped, tag = 'scoped memory for tpu_custom_call.1']
    #allocation4 [shape = 's32[1]{0}', space=sflag, size = 0x4, scoped, tag = 'scoped memory for tpu_custom_call.1']
    #allocation5 [shape = 's32[1]{0}', space=sflag, size = 0x4, scoped, tag = 'scoped memory for tpu_custom_call.1']
    #allocation6 [shape = 's32[1]{0}', space=sflag, size = 0x4, scoped, tag = 'scoped memory for tpu_custom_call.1']
    #allocation7 [shape = 'u8[512]{0}', space=smem, size = 0x200, scoped, tag = 'input window, operand 1, single buffered']
    #allocation8 [shape = 'u8[512]{0}', space=smem, size = 0x200, scoped, tag = 'input window, operand 2, single buffered']
    #allocation9 [shape = 's32[1]{0}', space=sflag, size = 0x4, scoped, tag = 'scoped memory for tpu_custom_call.1']
    #allocation10 [shape = 'u8[512]{0}', space=smem, size = 0x200, scoped, tag = 'input window, operand 3, single buffered']
    #allocation11 [shape = 'u8[8192]{0}', space=vmem, size = 0x2000, scoped, tag = 'input window, operand 4, single buffered']
    #allocation12 [shape = 'u8[8192]{0}', space=vmem, size = 0x2000, scoped, tag = 'output window, operand 0, single buffered']
    %10 = vsyncpa [#allocation5], 0
    %11 = vsyncpa [#allocation6], 0
    %12 = vsyncpa [#allocation9], 0
    %13 = vsyncpa [#allocation3], 0
    %14 = vsyncpa [#allocation4], 0
    // Predicated region
    $region2: #{tpu_custom_call.1} parent=1 // pred_check
      _
    $region3: #{tpu_custom_call.1} parent=1 // pred_check_branch
      %16 = sbr.rel (0) target = $region5
    $region4: #{tpu_custom_call.1} parent=1 // pred_region
      %s18 = ssub.s32 16, 16
      %19 = vsyncadd [#allocation5], %s18
      %22 = dma.hbm_to_smem %s0, 16, [#allocation2], [#allocation5]
    $region5: #{tpu_custom_call.1} parent=1 // pred_fallthru
      _
    // Predicated region
    $region6: #{tpu_custom_call.1} parent=1 // pred_check
      _
    $region7: #{tpu_custom_call.1} parent=1 // pred_check_branch
      %24 = sbr.rel (0) target = $region9
    $region8: #{tpu_custom_call.1} parent=1 // pred_region
      %s26 = ssub.s32 16, 16
      %27 = vsyncadd [#allocation6], %s26
      %s29 = sshll.u32 %s1, 4
      %s30 = int_to_ptr.vmem [resolvable:$true] %s29
      %32 = dma.vmem_to_smem %s30, 16, [#allocation7], [#allocation6]
    $region9: #{tpu_custom_call.1} parent=1 // pred_fallthru
      _
    // Predicated region
    $region10: #{tpu_custom_call.1} parent=1 // pred_check
      _
    $region11: #{tpu_custom_call.1} parent=1 // pred_check_branch
      %34 = sbr.rel (0) target = $region13
    $region12: #{tpu_custom_call.1} parent=1 // pred_region
      %s36 = ssub.s32 16, 16
      %37 = vsyncadd [#allocation9], %s36
      %s39 = sshll.u32 %s2, 4
      %s40 = int_to_ptr.vmem [resolvable:$true] %s39
      %42 = dma.vmem_to_smem %s40, 16, [#allocation8], [#allocation9]
    $region13: #{tpu_custom_call.1} parent=1 // pred_fallthru
      _
    // Predicated region
    $region14: #{tpu_custom_call.1} parent=1 // pred_check
      _
    $region15: #{tpu_custom_call.1} parent=1 // pred_check_branch
      %44 = sbr.rel (0) target = $region17
    $region16: #{tpu_custom_call.1} parent=1 // pred_region
      %s46 = ssub.s32 16, 16
      %47 = vsyncadd [#allocation9], %s46
      %s49 = sshll.u32 %s3, 4
      %s50 = int_to_ptr.vmem [resolvable:$true] %s49
      %52 = dma.vmem_to_smem %s50, 16, [#allocation10], [#allocation9]
    $region17: #{tpu_custom_call.1} parent=1 // pred_fallthru
      _
    // Predicated region
    $region18: #{tpu_custom_call.1} parent=1 // pred_check
      _
    $region19: #{tpu_custom_call.1} parent=1 // pred_check_branch
      %54 = sbr.rel (0) target = $region21
    $region20: #{tpu_custom_call.1} parent=1 // pred_region
      %s56 = ssub.s32 256, 256
      %57 = vsyncadd [#allocation3], %s56
      %s58 = sshll.u32 [#allocation11], 4
      %s59 = int_to_ptr.vmem [resolvable:$true] %s58
      %64 = dma.hbm_to_vmem [thread:$0]  %s4, 256, %s59, [#allocation3], 32, 32, 2
    $region21: #{tpu_custom_call.1} parent=1 // pred_fallthru
      _
    // Predicated region
    $region22: #{tpu_custom_call.1} parent=1 // pred_check
      _
    $region23: #{tpu_custom_call.1} parent=1 // pred_check_branch
      %66 = sbr.rel (0) target = $region25
    $region24: #{tpu_custom_call.1} parent=1 // pred_region
      %67 = dma.done [#allocation5], 16
    $region25: #{tpu_custom_call.1} parent=1 // pred_fallthru
      _
    // Predicated region
    $region26: #{tpu_custom_call.1} parent=1 // pred_check
      _
    $region27: #{tpu_custom_call.1} parent=1 // pred_check_branch
      %69 = sbr.rel (0) target = $region29
    $region28: #{tpu_custom_call.1} parent=1 // pred_region
      %70 = dma.done [#allocation6], 16
    $region29: #{tpu_custom_call.1} parent=1 // pred_fallthru
      _
    // Predicated region
    $region30: #{tpu_custom_call.1} parent=1 // pred_check
      _
    $region31: #{tpu_custom_call.1} parent=1 // pred_check_branch
      %72 = sbr.rel (0) target = $region33
    $region32: #{tpu_custom_call.1} parent=1 // pred_region
      %73 = dma.done [#allocation9], 16
    $region33: #{tpu_custom_call.1} parent=1 // pred_fallthru
      _
    // Predicated region
    $region34: #{tpu_custom_call.1} parent=1 // pred_check
      _
    $region35: #{tpu_custom_call.1} parent=1 // pred_check_branch
      %75 = sbr.rel (0) target = $region37
    $region36: #{tpu_custom_call.1} parent=1 // pred_region
      %76 = dma.done [#allocation9], 16
    $region37: #{tpu_custom_call.1} parent=1 // pred_fallthru
      _
    // Predicated region
    $region38: #{tpu_custom_call.1} parent=1 // pred_check
      _
    $region39: #{tpu_custom_call.1} parent=1 // pred_check_branch
      %78 = sbr.rel (0) target = $region41
    $region40: #{tpu_custom_call.1} parent=1 // pred_region
      %79 = dma.done [#allocation3], 256
    $region41: #{tpu_custom_call.1} parent=1 // pred_fallthru
      _
    %80 = sfence
    %s81 = sld [smem:[#allocation7]]
    %v82 = vstv %s81
    %s83 = sld [smem:[#allocation7 + $0x1]]
    %v84 = vstv %s83
    %v85 = vld [vmem:[#allocation11] sm:$0x3]
    %s86 = scalar_lea.vmem [#allocation11], 8
    %v87 = vld [vmem:[%s86] sm:$0x3]
    %v89 = vrot.slane %v87, 6
    %vm91 = vcmask 1041408
    %v92 = vsel %vm91, %v85, %v89
    %s93 = sld [smem:[#allocation2]]
    %v94 = vstv %s93
    %v95 = vmul.f32 %v94, %v92
    %v96 = vadd.f32 %v82, %v95
    %s97 = sld [smem:[#allocation2 + $0x4]]
    %v98 = vstv %s97
    %v99 = vmul.f32 %v98, %v92
    %v100 = vadd.f32 %v84, %v99
    %s101 = scalar_lea.vmem [#allocation11], 2
    %v102 = vld [vmem:[%s101] sm:$0x3]
    %s103 = scalar_lea.vmem [#allocation11], 10
    %v104 = vld [vmem:[%s103] sm:$0x3]
    %v106 = vrot.slane %v104, 6
    %v108 = vsel %vm91, %v102, %v106
    %s109 = sld [smem:[#allocation2 + $0x1]]
    %v110 = vstv %s109
    %v111 = vmul.f32 %v110, %v108
    %v112 = vadd.f32 %v96, %v111
    %s113 = sld [smem:[#allocation2 + $0x5]]
    %v114 = vstv %s113
    %v115 = vmul.f32 %v114, %v108
    %v116 = vadd.f32 %v100, %v115
    %s117 = scalar_lea.vmem [#allocation11], 4
    %v118 = vld [vmem:[%s117] sm:$0x3]
    %s119 = scalar_lea.vmem [#allocation11], 12
    %v120 = vld [vmem:[%s119] sm:$0x3]
    %v122 = vrot.slane %v120, 6
    %v124 = vsel %vm91, %v118, %v122
    %s125 = sld [smem:[#allocation2 + $0x2]]
    %v126 = vstv %s125
    %v127 = vmul.f32 %v126, %v124
    %v128 = vadd.f32 %v112, %v127
    %s129 = sld [smem:[#allocation2 + $0x6]]
    %v130 = vstv %s129
    %v131 = vmul.f32 %v130, %v124
    %v132 = vadd.f32 %v116, %v131
    %s133 = scalar_lea.vmem [#allocation11], 6
    %v134 = vld [vmem:[%s133] sm:$0x3]
    %s135 = scalar_lea.vmem [#allocation11], 14
    %v136 = vld [vmem:[%s135] sm:$0x3]
    %v138 = vrot.slane %v136, 6
    %v140 = vsel %vm91, %v134, %v138
    %s141 = sld [smem:[#allocation2 + $0x3]]
    %v142 = vstv %s141
    %v143 = vmul.f32 %v142, %v140
    %v144 = vadd.f32 %v128, %v143
    %s145 = sld [smem:[#allocation2 + $0x7]]
    %v146 = vstv %s145
    %v147 = vmul.f32 %v146, %v140
    %v148 = vadd.f32 %v132, %v147
    %vm149 = vcmp.gt.f32.partialorder %v144, 0.0
    %v150 = vmul.f32 %v144, 0.1
    %v151 = vsel %vm149, %v144, %v150
    %vm152 = vcmp.gt.f32.partialorder %v148, 0.0
    %v153 = vmul.f32 %v148, 0.1
    %v154 = vsel %vm152, %v148, %v153
    %v155 = vlaneseq
    %v156 = vshrl.u32 %v155, 7
    %v157 = vlaneseq
    %v158 = vand.u32 %v157, 127
    %v159 = vand.u32 %v156, 1
    %v160 = vmul.u32 %v159, 128
    %v161 = vadd.s32 %v160, %v158
    %v162 = vand.u32 %v161, 15
    %v163 = vshra.s32 %v161, 4
    %vm164 = vcmp.ge.s32.totalorder %v163, 1
    %vm165 = vcmp.lt.s32.totalorder %v163, 15
    %vm166 = vcmp.ge.s32.totalorder %v162, 1
    %vm167 = vcmp.lt.s32.totalorder %v162, 15
    %vm168 = vmand %vm164, %vm166
    %vm169 = vmand %vm164, %vm167
    %vm170 = vmand %vm165, %vm166
    %vm171 = vmand %vm165, %vm167
    %s172 = sld [smem:[#allocation10]]
    %v173 = vstv %s172
    %s174 = sld [smem:[#allocation10 + $0x1]]
    %v175 = vstv %s174
    %s176 = sld [smem:[#allocation10 + $0x2]]
    %v177 = vstv %s176
    %s178 = sld [smem:[#allocation10 + $0x3]]
    %v179 = vstv %s178
    %180 = vrot.lane.b32.xlu0 %v151, 17
    %v181 = vpop.permute.xlu0 %180
    %vm182 = vcmp.ge.s32.totalorder %v158, 17
    %v184 = vrot.slane %v181, 3
    %v186 = vrot.slane %v181, 7
    %vm188 = vcmask 1040384
    %v189 = vsel %vm188, %v184, %v186
    %v190 = vsel %vm182, %v181, %v189
    %v191 = vsel %vm168, %v190, 0.0
    %s192 = sld [smem:[#allocation8]]
    %v193 = vstv %s192
    %v194 = vmul.f32 %v193, %v191
    %v195 = vadd.f32 %v173, %v194
    %s196 = sld [smem:[#allocation8 + $0x12]]
    %v197 = vstv %s196
    %v198 = vmul.f32 %v197, %v191
    %v199 = vadd.f32 %v175, %v198
    %s200 = sld [smem:[#allocation8 + $0x24]]
    %v201 = vstv %s200
    %v202 = vmul.f32 %v201, %v191
    %v203 = vadd.f32 %v177, %v202
    %s204 = sld [smem:[#allocation8 + $0x36]]
    %v205 = vstv %s204
    %v206 = vmul.f32 %v205, %v191
    %v207 = vadd.f32 %v179, %v206
    %208 = vrot.lane.b32.xlu0 %v151, 16
    %v209 = vpop.permute.xlu0 %208
    %vm210 = vcmp.ge.s32.totalorder %v158, 16
    %v212 = vrot.slane %v209, 3
    %v214 = vrot.slane %v209, 7
    %v216 = vsel %vm188, %v212, %v214
    %v217 = vsel %vm210, %v209, %v216
    %v218 = vsel %vm164, %v217, 0.0
    %s219 = sld [smem:[#allocation8 + $0x1]]
    %v220 = vstv %s219
    %v221 = vmul.f32 %v220, %v218
    %v222 = vadd.f32 %v195, %v221
    %s223 = sld [smem:[#allocation8 + $0x13]]
    %v224 = vstv %s223
    %v225 = vmul.f32 %v224, %v218
    %v226 = vadd.f32 %v199, %v225
    %s227 = sld [smem:[#allocation8 + $0x25]]
    %v228 = vstv %s227
    %v229 = vmul.f32 %v228, %v218
    %v230 = vadd.f32 %v203, %v229
    %s231 = sld [smem:[#allocation8 + $0x37]]
    %v232 = vstv %s231
    %v233 = vmul.f32 %v232, %v218
    %v234 = vadd.f32 %v207, %v233
    %235 = vrot.lane.b32.xlu0 %v151, 15
    %v236 = vpop.permute.xlu0 %235
    %vm237 = vcmp.ge.s32.totalorder %v158, 15
    %v239 = vrot.slane %v236, 3
    %v241 = vrot.slane %v236, 7
    %v243 = vsel %vm188, %v239, %v241
    %v244 = vsel %vm237, %v236, %v243
    %v245 = vsel %vm169, %v244, 0.0
    %s246 = sld [smem:[#allocation8 + $0x2]]
    %v247 = vstv %s246
    %v248 = vmul.f32 %v247, %v245
    %v249 = vadd.f32 %v222, %v248
    %s250 = sld [smem:[#allocation8 + $0x14]]
    %v251 = vstv %s250
    %v252 = vmul.f32 %v251, %v245
    %v253 = vadd.f32 %v226, %v252
    %s254 = sld [smem:[#allocation8 + $0x26]]
    %v255 = vstv %s254
    %v256 = vmul.f32 %v255, %v245
    %v257 = vadd.f32 %v230, %v256
    %s258 = sld [smem:[#allocation8 + $0x38]]
    %v259 = vstv %s258
    %v260 = vmul.f32 %v259, %v245
    %v261 = vadd.f32 %v234, %v260
    %262 = vrot.lane.b32.xlu0 %v151, 1
    %v263 = vpop.permute.xlu0 %262
    %vm264 = vcmp.ge.s32.totalorder %v158, 1
    %v266 = vrot.slane %v263, 3
    %v268 = vrot.slane %v263, 7
    %v270 = vsel %vm188, %v266, %v268
    %v271 = vsel %vm264, %v263, %v270
    %v272 = vsel %vm166, %v271, 0.0
    %s273 = sld [smem:[#allocation8 + $0x3]]
    %v274 = vstv %s273
    %v275 = vmul.f32 %v274, %v272
    %v276 = vadd.f32 %v249, %v275
    %s277 = sld [smem:[#allocation8 + $0x15]]
    %v278 = vstv %s277
    %v279 = vmul.f32 %v278, %v272
    %v280 = vadd.f32 %v253, %v279
    %s281 = sld [smem:[#allocation8 + $0x27]]
    %v282 = vstv %s281
    %v283 = vmul.f32 %v282, %v272
    %v284 = vadd.f32 %v257, %v283
    %s285 = sld [smem:[#allocation8 + $0x39]]
    %v286 = vstv %s285
    %v287 = vmul.f32 %v286, %v272
    %v288 = vadd.f32 %v261, %v287
    %s289 = sld [smem:[#allocation8 + $0x4]]
    %v290 = vstv %s289
    %v291 = vmul.f32 %v290, %v151
    %v292 = vadd.f32 %v276, %v291
    %s293 = sld [smem:[#allocation8 + $0x16]]
    %v294 = vstv %s293
    %v295 = vmul.f32 %v294, %v151
    %v296 = vadd.f32 %v280, %v295
    %s297 = sld [smem:[#allocation8 + $0x28]]
    %v298 = vstv %s297
    %v299 = vmul.f32 %v298, %v151
    %v300 = vadd.f32 %v284, %v299
    %s301 = sld [smem:[#allocation8 + $0x3a]]
    %v302 = vstv %s301
    %v303 = vmul.f32 %v302, %v151
    %v304 = vadd.f32 %v288, %v303
    %305 = vrot.lane.b32.xlu0 %v151, 127
    %v306 = vpop.permute.xlu0 %305
    %vm307 = vcmp.lt.s32.totalorder %v158, 127
    %v309 = vrot.slane %v306, 1
    %v311 = vrot.slane %v306, 5
    %vm313 = vcmask 1042432
    %v314 = vsel %vm313, %v309, %v311
    %v315 = vsel %vm307, %v306, %v314
    %v316 = vsel %vm167, %v315, 0.0
    %s317 = sld [smem:[#allocation8 + $0x5]]
    %v318 = vstv %s317
    %v319 = vmul.f32 %v318, %v316
    %v320 = vadd.f32 %v292, %v319
    %s321 = sld [smem:[#allocation8 + $0x17]]
    %v322 = vstv %s321
    %v323 = vmul.f32 %v322, %v316
    %v324 = vadd.f32 %v296, %v323
    %s325 = sld [smem:[#allocation8 + $0x29]]
    %v326 = vstv %s325
    %v327 = vmul.f32 %v326, %v316
    %v328 = vadd.f32 %v300, %v327
    %s329 = sld [smem:[#allocation8 + $0x3b]]
    %v330 = vstv %s329
    %v331 = vmul.f32 %v330, %v316
    %v332 = vadd.f32 %v304, %v331
    %333 = vrot.lane.b32.xlu0 %v151, 113
    %v334 = vpop.permute.xlu0 %333
    %vm335 = vcmp.lt.s32.totalorder %v158, 113
    %v337 = vrot.slane %v334, 1
    %v339 = vrot.slane %v334, 5
    %v341 = vsel %vm313, %v337, %v339
    %v342 = vsel %vm335, %v334, %v341
    %v343 = vsel %vm170, %v342, 0.0
    %s344 = sld [smem:[#allocation8 + $0x6]]
    %v345 = vstv %s344
    %v346 = vmul.f32 %v345, %v343
    %v347 = vadd.f32 %v320, %v346
    %s348 = sld [smem:[#allocation8 + $0x18]]
    %v349 = vstv %s348
    %v350 = vmul.f32 %v349, %v343
    %v351 = vadd.f32 %v324, %v350
    %s352 = sld [smem:[#allocation8 + $0x2a]]
    %v353 = vstv %s352
    %v354 = vmul.f32 %v353, %v343
    %v355 = vadd.f32 %v328, %v354
    %s356 = sld [smem:[#allocation8 + $0x3c]]
    %v357 = vstv %s356
    %v358 = vmul.f32 %v357, %v343
    %v359 = vadd.f32 %v332, %v358
    %360 = vrot.lane.b32.xlu0 %v151, 112
    %v361 = vpop.permute.xlu0 %360
    %vm362 = vcmp.lt.s32.totalorder %v158, 112
    %v364 = vrot.slane %v361, 1
    %v366 = vrot.slane %v361, 5
    %v368 = vsel %vm313, %v364, %v366
    %v369 = vsel %vm362, %v361, %v368
    %v370 = vsel %vm165, %v369, 0.0
    %s371 = sld [smem:[#allocation8 + $0x7]]
    %v372 = vstv %s371
    %v373 = vmul.f32 %v372, %v370
    %v374 = vadd.f32 %v347, %v373
    %s375 = sld [smem:[#allocation8 + $0x19]]
    %v376 = vstv %s375
    %v377 = vmul.f32 %v376, %v370
    %v378 = vadd.f32 %v351, %v377
    %s379 = sld [smem:[#allocation8 + $0x2b]]
    %v380 = vstv %s379
    %v381 = vmul.f32 %v380, %v370
    %v382 = vadd.f32 %v355, %v381
    %s383 = sld [smem:[#allocation8 + $0x3d]]
    %v384 = vstv %s383
    %v385 = vmul.f32 %v384, %v370
    %v386 = vadd.f32 %v359, %v385
    %387 = vrot.lane.b32.xlu0 %v151, 111
    %v388 = vpop.permute.xlu0 %387
    %vm389 = vcmp.lt.s32.totalorder %v158, 111
    %v391 = vrot.slane %v388, 1
    %v393 = vrot.slane %v388, 5
    %v395 = vsel %vm313, %v391, %v393
    %v396 = vsel %vm389, %v388, %v395
    %v397 = vsel %vm171, %v396, 0.0
    %s398 = sld [smem:[#allocation8 + $0x8]]
    %v399 = vstv %s398
    %v400 = vmul.f32 %v399, %v397
    %v401 = vadd.f32 %v374, %v400
    %s402 = sld [smem:[#allocation8 + $0x1a]]
    %v403 = vstv %s402
    %v404 = vmul.f32 %v403, %v397
    %v405 = vadd.f32 %v378, %v404
    %s406 = sld [smem:[#allocation8 + $0x2c]]
    %v407 = vstv %s406
    %v408 = vmul.f32 %v407, %v397
    %v409 = vadd.f32 %v382, %v408
    %s410 = sld [smem:[#allocation8 + $0x3e]]
    %v411 = vstv %s410
    %v412 = vmul.f32 %v411, %v397
    %v413 = vadd.f32 %v386, %v412
    %414 = vrot.lane.b32.xlu0 %v154, 17
    %v415 = vpop.permute.xlu0 %414
    %v417 = vrot.slane %v415, 3
    %v419 = vrot.slane %v415, 7
    %v421 = vsel %vm188, %v417, %v419
    %v422 = vsel %vm182, %v415, %v421
    %v423 = vsel %vm168, %v422, 0.0
    %s424 = sld [smem:[#allocation8 + $0x9]]
    %v425 = vstv %s424
    %v426 = vmul.f32 %v425, %v423
    %v427 = vadd.f32 %v401, %v426
    %s428 = sld [smem:[#allocation8 + $0x1b]]
    %v429 = vstv %s428
    %v430 = vmul.f32 %v429, %v423
    %v431 = vadd.f32 %v405, %v430
    %s432 = sld [smem:[#allocation8 + $0x2d]]
    %v433 = vstv %s432
    %v434 = vmul.f32 %v433, %v423
    %v435 = vadd.f32 %v409, %v434
    %s436 = sld [smem:[#allocation8 + $0x3f]]
    %v437 = vstv %s436
    %v438 = vmul.f32 %v437, %v423
    %v439 = vadd.f32 %v413, %v438
    %440 = vrot.lane.b32.xlu0 %v154, 16
    %v441 = vpop.permute.xlu0 %440
    %v443 = vrot.slane %v441, 3
    %v445 = vrot.slane %v441, 7
    %v447 = vsel %vm188, %v443, %v445
    %v448 = vsel %vm210, %v441, %v447
    %v449 = vsel %vm164, %v448, 0.0
    %s450 = sld [smem:[#allocation8 + $0xa]]
    %v451 = vstv %s450
    %v452 = vmul.f32 %v451, %v449
    %v453 = vadd.f32 %v427, %v452
    %s454 = sld [smem:[#allocation8 + $0x1c]]
    %v455 = vstv %s454
    %v456 = vmul.f32 %v455, %v449
    %v457 = vadd.f32 %v431, %v456
    %s458 = sld [smem:[#allocation8 + $0x2e]]
    %v459 = vstv %s458
    %v460 = vmul.f32 %v459, %v449
    %v461 = vadd.f32 %v435, %v460
    %s462 = sld [smem:[#allocation8 + $0x40]]
    %v463 = vstv %s462
    %v464 = vmul.f32 %v463, %v449
    %v465 = vadd.f32 %v439, %v464
    %466 = vrot.lane.b32.xlu0 %v154, 15
    %v467 = vpop.permute.xlu0 %466
    %v469 = vrot.slane %v467, 3
    %v471 = vrot.slane %v467, 7
    %v473 = vsel %vm188, %v469, %v471
    %v474 = vsel %vm237, %v467, %v473
    %v475 = vsel %vm169, %v474, 0.0
    %s476 = sld [smem:[#allocation8 + $0xb]]
    %v477 = vstv %s476
    %v478 = vmul.f32 %v477, %v475
    %v479 = vadd.f32 %v453, %v478
    %s480 = sld [smem:[#allocation8 + $0x1d]]
    %v481 = vstv %s480
    %v482 = vmul.f32 %v481, %v475
    %v483 = vadd.f32 %v457, %v482
    %s484 = sld [smem:[#allocation8 + $0x2f]]
    %v485 = vstv %s484
    %v486 = vmul.f32 %v485, %v475
    %v487 = vadd.f32 %v461, %v486
    %s488 = sld [smem:[#allocation8 + $0x41]]
    %v489 = vstv %s488
    %v490 = vmul.f32 %v489, %v475
    %v491 = vadd.f32 %v465, %v490
    %492 = vrot.lane.b32.xlu0 %v154, 1
    %v493 = vpop.permute.xlu0 %492
    %v495 = vrot.slane %v493, 3
    %v497 = vrot.slane %v493, 7
    %v499 = vsel %vm188, %v495, %v497
    %v500 = vsel %vm264, %v493, %v499
    %v501 = vsel %vm166, %v500, 0.0
    %s502 = sld [smem:[#allocation8 + $0xc]]
    %v503 = vstv %s502
    %v504 = vmul.f32 %v503, %v501
    %v505 = vadd.f32 %v479, %v504
    %s506 = sld [smem:[#allocation8 + $0x1e]]
    %v507 = vstv %s506
    %v508 = vmul.f32 %v507, %v501
    %v509 = vadd.f32 %v483, %v508
    %s510 = sld [smem:[#allocation8 + $0x30]]
    %v511 = vstv %s510
    %v512 = vmul.f32 %v511, %v501
    %v513 = vadd.f32 %v487, %v512
    %s514 = sld [smem:[#allocation8 + $0x42]]
    %v515 = vstv %s514
    %v516 = vmul.f32 %v515, %v501
    %v517 = vadd.f32 %v491, %v516
    %s518 = sld [smem:[#allocation8 + $0xd]]
    %v519 = vstv %s518
    %v520 = vmul.f32 %v519, %v154
    %v521 = vadd.f32 %v505, %v520
    %s522 = sld [smem:[#allocation8 + $0x1f]]
    %v523 = vstv %s522
    %v524 = vmul.f32 %v523, %v154
    %v525 = vadd.f32 %v509, %v524
    %s526 = sld [smem:[#allocation8 + $0x31]]
    %v527 = vstv %s526
    %v528 = vmul.f32 %v527, %v154
    %v529 = vadd.f32 %v513, %v528
    %s530 = sld [smem:[#allocation8 + $0x43]]
    %v531 = vstv %s530
    %v532 = vmul.f32 %v531, %v154
    %v533 = vadd.f32 %v517, %v532
    %534 = vrot.lane.b32.xlu0 %v154, 127
    %v535 = vpop.permute.xlu0 %534
    %v537 = vrot.slane %v535, 1
    %v539 = vrot.slane %v535, 5
    %v541 = vsel %vm313, %v537, %v539
    %v542 = vsel %vm307, %v535, %v541
    %v543 = vsel %vm167, %v542, 0.0
    %s544 = sld [smem:[#allocation8 + $0xe]]
    %v545 = vstv %s544
    %v546 = vmul.f32 %v545, %v543
    %v547 = vadd.f32 %v521, %v546
    %s548 = sld [smem:[#allocation8 + $0x20]]
    %v549 = vstv %s548
    %v550 = vmul.f32 %v549, %v543
    %v551 = vadd.f32 %v525, %v550
    %s552 = sld [smem:[#allocation8 + $0x32]]
    %v553 = vstv %s552
    %v554 = vmul.f32 %v553, %v543
    %v555 = vadd.f32 %v529, %v554
    %s556 = sld [smem:[#allocation8 + $0x44]]
    %v557 = vstv %s556
    %v558 = vmul.f32 %v557, %v543
    %v559 = vadd.f32 %v533, %v558
    %560 = vrot.lane.b32.xlu0 %v154, 113
    %v561 = vpop.permute.xlu0 %560
    %v563 = vrot.slane %v561, 1
    %v565 = vrot.slane %v561, 5
    %v567 = vsel %vm313, %v563, %v565
    %v568 = vsel %vm335, %v561, %v567
    %v569 = vsel %vm170, %v568, 0.0
    %s570 = sld [smem:[#allocation8 + $0xf]]
    %v571 = vstv %s570
    %v572 = vmul.f32 %v571, %v569
    %v573 = vadd.f32 %v547, %v572
    %s574 = sld [smem:[#allocation8 + $0x21]]
    %v575 = vstv %s574
    %v576 = vmul.f32 %v575, %v569
    %v577 = vadd.f32 %v551, %v576
    %s578 = sld [smem:[#allocation8 + $0x33]]
    %v579 = vstv %s578
    %v580 = vmul.f32 %v579, %v569
    %v581 = vadd.f32 %v555, %v580
    %s582 = sld [smem:[#allocation8 + $0x45]]
    %v583 = vstv %s582
    %v584 = vmul.f32 %v583, %v569
    %v585 = vadd.f32 %v559, %v584
    %586 = vrot.lane.b32.xlu0 %v154, 112
    %v587 = vpop.permute.xlu0 %586
    %v589 = vrot.slane %v587, 1
    %v591 = vrot.slane %v587, 5
    %v593 = vsel %vm313, %v589, %v591
    %v594 = vsel %vm362, %v587, %v593
    %v595 = vsel %vm165, %v594, 0.0
    %s596 = sld [smem:[#allocation8 + $0x10]]
    %v597 = vstv %s596
    %v598 = vmul.f32 %v597, %v595
    %v599 = vadd.f32 %v573, %v598
    %s600 = sld [smem:[#allocation8 + $0x22]]
    %v601 = vstv %s600
    %v602 = vmul.f32 %v601, %v595
    %v603 = vadd.f32 %v577, %v602
    %s604 = sld [smem:[#allocation8 + $0x34]]
    %v605 = vstv %s604
    %v606 = vmul.f32 %v605, %v595
    %v607 = vadd.f32 %v581, %v606
    %s608 = sld [smem:[#allocation8 + $0x46]]
    %v609 = vstv %s608
    %v610 = vmul.f32 %v609, %v595
    %v611 = vadd.f32 %v585, %v610
    %612 = vrot.lane.b32.xlu0 %v154, 111
    %v613 = vpop.permute.xlu0 %612
    %v615 = vrot.slane %v613, 1
    %v617 = vrot.slane %v613, 5
    %v619 = vsel %vm313, %v615, %v617
    %v620 = vsel %vm389, %v613, %v619
    %v621 = vsel %vm171, %v620, 0.0
    %s622 = sld [smem:[#allocation8 + $0x11]]
    %v623 = vstv %s622
    %v624 = vmul.f32 %v623, %v621
    %v625 = vadd.f32 %v599, %v624
    %s626 = sld [smem:[#allocation8 + $0x23]]
    %v627 = vstv %s626
    %v628 = vmul.f32 %v627, %v621
    %v629 = vadd.f32 %v603, %v628
    %s630 = sld [smem:[#allocation8 + $0x35]]
    %v631 = vstv %s630
    %v632 = vmul.f32 %v631, %v621
    %v633 = vadd.f32 %v607, %v632
    %s634 = sld [smem:[#allocation8 + $0x47]]
    %v635 = vstv %s634
    %v636 = vmul.f32 %v635, %v621
    %v637 = vadd.f32 %v611, %v636
    %vm638 = vcmp.gt.f32.partialorder %v625, 0.0
    %v639 = vmul.f32 %v625, 0.1
    %v640 = vsel %vm638, %v625, %v639
    %v641 = vadd.f32 %v92, %v640
    %642 = vst [vmem:[#allocation12] sm:$0x3] %v641
    %s643 = scalar_lea.vmem [#allocation12], 8
    %644 = vst [vmem:[%s643 - $0x2] sm:$0xc] %v641
    %v645 = vld [vmem:[%s101] sm:$0x3]
    %v646 = vld [vmem:[%s103] sm:$0x3]
    %v648 = vrot.slane %v646, 6
    %v650 = vsel %vm91, %v645, %v648
    %vm651 = vcmp.gt.f32.partialorder %v629, 0.0
    %v652 = vmul.f32 %v629, 0.1
    %v653 = vsel %vm651, %v629, %v652
    %v654 = vadd.f32 %v650, %v653
    %s655 = scalar_lea.vmem [#allocation12], 2
    %656 = vst [vmem:[%s655] sm:$0x3] %v654
    %s657 = scalar_lea.vmem [#allocation12], 10
    %658 = vst [vmem:[%s657 - $0x2] sm:$0xc] %v654
    %v659 = vld [vmem:[%s117] sm:$0x3]
    %v660 = vld [vmem:[%s119] sm:$0x3]
    %v662 = vrot.slane %v660, 6
    %v664 = vsel %vm91, %v659, %v662
    %vm665 = vcmp.gt.f32.partialorder %v633, 0.0
    %v666 = vmul.f32 %v633, 0.1
    %v667 = vsel %vm665, %v633, %v666
    %v668 = vadd.f32 %v664, %v667
    %s669 = scalar_lea.vmem [#allocation12], 4
    %670 = vst [vmem:[%s669] sm:$0x3] %v668
    %s671 = scalar_lea.vmem [#allocation12], 12
    %672 = vst [vmem:[%s671 - $0x2] sm:$0xc] %v668
    %v673 = vld [vmem:[%s133] sm:$0x3]
    %v674 = vld [vmem:[%s135] sm:$0x3]
    %v676 = vrot.slane %v674, 6
    %v678 = vsel %vm91, %v673, %v676
    %vm679 = vcmp.gt.f32.partialorder %v637, 0.0
    %v680 = vmul.f32 %v637, 0.1
    %v681 = vsel %vm679, %v637, %v680
    %v682 = vadd.f32 %v678, %v681
    %s683 = scalar_lea.vmem [#allocation12], 6
    %684 = vst [vmem:[%s683] sm:$0x3] %v682
    %s685 = scalar_lea.vmem [#allocation12], 14
    %686 = vst [vmem:[%s685 - $0x2] sm:$0xc] %v682
    // Predicated region
    $region42: #{tpu_custom_call.1} parent=1 // pred_check
      _
    $region43: #{tpu_custom_call.1} parent=1 // pred_check_branch
      %688 = sbr.rel (0) target = $region45
    $region44: #{tpu_custom_call.1} parent=1 // pred_region
      %s690 = ssub.s32 256, 256
      %691 = vsyncadd [#allocation4], %s690
      %s692 = sshll.u32 [#allocation12], 4
      %s693 = int_to_ptr.vmem [resolvable:$true] %s692
      %698 = dma.vmem_to_hbm [thread:$0]  %s693, 256, %s5, [#allocation4], 32, 32, 2
    $region45: #{tpu_custom_call.1} parent=1 // pred_fallthru
      _
    // Predicated region
    $region46: #{tpu_custom_call.1} parent=1 // pred_check
      _
    $region47: #{tpu_custom_call.1} parent=1 // pred_check_branch
      %700 = sbr.rel (0) target = $region49
    $region48: #{tpu_custom_call.1} parent=1 // pred_region
      %701 = dma.done [#allocation4], 256
    $region49: #{tpu_custom_call.1} parent=1 // pred_fallthru
      _
    %702 = vsyncpa [#allocation3], 1
    %703 = vsyncpa [#allocation4], 1
    %704 = vsyncpa [#allocation5], 1
    %705 = vsyncpa [#allocation6], 1
    %706 = vsyncpa [#allocation9], 1

</llo_original>
